<compile_context>
chip_gen: v6e
topology: v6e:2x2x1
jax: 0.10.0
libtpu: 0.0.40
codegen_flags: <defaults>
</compile_context>

<pallas_src>
import functools

import numpy as np
import jax
import jax.numpy as jnp
from jax.experimental import pallas as pl
from jax.experimental.pallas import tpu as pltpu

_HI = jax.lax.Precision.HIGHEST


# ----------------------------------------------------------------------------
# Host-side constant builders (static shapes; exact 0/1 selections x weights)
# ----------------------------------------------------------------------------
def conv_row_toeplitz(w_hwio, w_in, stride, pad_mode):
    """Fold the 3 width taps + width padding (+ column stride) of a 3x3 conv.

    Returns T of shape (3, w_in*Cin, w_out*Cout): for kernel row dy, the
    contribution of (already vertically selected) input row r is x_row @ T[dy].
    """
    cin, cout = int(w_hwio.shape[2]), int(w_hwio.shape[3])
    w_out = w_in if stride == 1 else w_in // 2
    P = np.zeros((3, w_out, w_in), np.float32)
    for dx in range(3):
        for j in range(w_out):
            p = stride * j + dx - 1            # column in the un-padded image
            if pad_mode == "reflect":
                if p < 0:
                    p = -p
                elif p >= w_in:
                    p = 2 * w_in - 2 - p
                P[dx, j, p] = 1.0
            else:                              # zero padding: drop OOB taps
                if 0 <= p < w_in:
                    P[dx, j, p] = 1.0
    T = jnp.einsum("xjp,yxio->ypijo", jnp.asarray(P), w_hwio, precision=_HI)
    return T.reshape(3, w_in * cin, w_out * cout)


def stacked_toeplitz(w_hwio, w_in, stride, pad_mode):
    """Same, but with the 3 vertical taps stacked along K (dy-major blocks)."""
    t = conv_row_toeplitz(w_hwio, w_in, stride, pad_mode)
    return t.reshape(t.shape[0] * t.shape[1], t.shape[2])


def pixel_shuffle_col_select(w, c, r=2):
    """PixelShuffle(2) column selection matrices for even / odd output rows.

    v_even / v_odd: (W*4C, 2W*C) 0/1 matrices so that the conv_pre output row
    (lane layout w-major, channel-minor, channels ordered (c, i, j)) right-
    multiplied gives the even / odd output rows of the upsampled image.
    """
    v = np.zeros((r, w * r * r * c, r * w * c), np.float32)
    for i in range(r):                 # output row parity
        for ww in range(w):
            for cc in range(c):
                for j in range(r):     # output column parity
                    v[i, ww * (r * r * c) + cc * (r * r) + i * r + j,
                      (r * ww + j) * c + cc] = 1.0
    return jnp.asarray(v[0]), jnp.asarray(v[1])


def _ceil128(n):
    return ((n + 127) // 128) * 128


# ----------------------------------------------------------------------------
# Fused Pallas kernel: the whole DualUpDownLayer forward (all batches at once)
# ----------------------------------------------------------------------------
def _fused_kernel(dims, with_relu,
                  x_ref, res_ref, ta_ref, tb_ref, p_ref,
                  out_ref, resout_ref):
    B, H, W, C, R = dims
    H2, W2 = 2 * H, 2 * W
    WC, W2C = W * C, W2 * C
    WCp, W2Cp = _ceil128(WC), _ceil128(W2C)
    cdt = ta_ref.dtype                      # matmul operand dtype (bf16)

    def mm(a, t):
        """(B, rows, K) x (K, N) -> (B, rows, N), f32 accumulation on the MXU."""
        m = a.shape[0] * a.shape[1]
        y = jnp.dot(a.reshape(m, a.shape[-1]), t,
                    preferred_element_type=jnp.float32)
        return y.reshape(a.shape[0], a.shape[1], t.shape[-1])

    def vprev(a, top):                      # per-batch "row i-1" slab
        top = jnp.zeros_like(a[:, :1, :]) if top is None else top
        return jnp.concatenate([top, a[:, :-1, :]], axis=1)

    def vnext(a, bot):                      # per-batch "row i+1" slab
        bot = jnp.zeros_like(a[:, -1:, :]) if bot is None else bot
        return jnp.concatenate([a[:, 1:, :], bot], axis=1)

    def conv_lr(a, t, bias):
        """3x3 conv, reflect pad, stride 1, on the low-res (B, H, W*Cin) slab."""
        a = a.astype(cdt)
        xs = jnp.concatenate(
            [vprev(a, a[:, 1:2, :]), a, vnext(a, a[:, -2:-1, :])], axis=2)
        y = mm(xs, t)
        return y if bias is None else y + bias

    def conv_hr(e, o, t, bias, reflect):
        """3x3 conv on the 2H-row image held as even/odd row slabs (B,H,W2*C)."""
        e = e.astype(cdt)
        o = o.astype(cdt)
        top = o[:, :1, :] if reflect else None     # full row -1 -> full row 1
        bot = e[:, -1:, :] if reflect else None    # full row 2H -> full row 2H-2
        xe = jnp.concatenate([vprev(o, top), e, o], axis=2)  # rows 2i-1,2i,2i+1
        xo = jnp.concatenate([e, o, vnext(e, bot)], axis=2)  # rows 2i,2i+1,2i+2
        y = mm(jnp.concatenate([xe, xo], axis=1), t)         # (B, 2H, N)
        if bias is not None:
            y = y + bias
        return y[:, :H, :], y[:, H:, :]

    def conv_dn(e, o, t, bias):
        """3x3 conv, reflect pad, stride 2 -> only even output rows needed."""
        e = e.astype(cdt)
        o = o.astype(cdt)
        xs = jnp.concatenate([vprev(o, o[:, :1, :]), e, o], axis=2)
        return mm(xs, t) + bias

    x = x_ref[...]                                   # (B, H, W*C) f32
    res_e = res_ref[:, :, 0:W2C]                     # even rows of res
    res_o = res_ref[:, :, W2C:2 * W2C]               # odd rows of res

    # --- packed weight slabs (bf16, each component starts on a 128-lane tile)
    t1 = ta_ref[:, 0:WC]
    t2 = ta_ref[:, WCp:WCp + WC]
    tpre = ta_ref[:, 2 * WCp:2 * WCp + 2 * W2C]      # conv_pre with PS folded in
    tup = tb_ref[:, 0:W2C]
    ts1 = tb_ref[:, W2Cp:W2Cp + W2C]
    ts2 = tb_ref[:, 2 * W2Cp:2 * W2Cp + W2C]
    tdn = tb_ref[:, 3 * W2Cp:3 * W2Cp + WC]

    # --- packed f32 params (biases + SE fc weights) ---
    b1 = p_ref[0:1, 0:WC]
    b2 = p_ref[1:2, 0:WC]
    bpre = p_ref[2:3, 0:2 * W2C]
    bup = p_ref[3:4, 0:W2C]
    bdn = p_ref[4:5, 0:WC]
    fc1w = p_ref[5:5 + C, 0:R]                       # (C, R)
    fc1b = p_ref[5 + C:6 + C, 0:R]                   # (1, R)
    fc2wT = p_ref[6 + C:6 + 2 * C, 0:R]              # (C, R), row c = fc2_w[:, c]
    fc2b = p_ref[6 + 2 * C:7 + 2 * C, 0:C]           # (1, C)

    # --- low-res branch: conv1 -> relu ; conv2 -> +x -> relu ; conv_pre ---
    t = jnp.maximum(conv_lr(x, t1, b1), 0.0)
    t = jnp.maximum(conv_lr(t, t2, b2) + x, 0.0)
    pre = conv_lr(t, tpre, bpre)                     # (B, H, 2*W2C) = [PS even|PS odd]
    ps_e = pre[:, :, 0:W2C]
    ps_o = pre[:, :, W2C:2 * W2C]

    # --- up_conv (reflect) -> +res -> relu  (this is the returned `res`) ---
    ue, uo = conv_hr(ps_e, ps_o, tup, bup, reflect=True)
    up_e = jnp.maximum(ue + res_e, 0.0)
    up_o = jnp.maximum(uo + res_o, 0.0)
    resout_ref[:, :, 0:W2C] = up_e.astype(resout_ref.dtype)
    resout_ref[:, :, W2C:2 * W2C] = up_o.astype(resout_ref.dtype)

    # --- SEBasicBlock: conv3x3(zero) -> relu -> conv3x3(zero) -> SE -> +up -> relu
    se_e, se_o = conv_hr(up_e, up_o, ts1, None, reflect=False)
    se_e, se_o = jnp.maximum(se_e, 0.0), jnp.maximum(se_o, 0.0)
    se_e, se_o = conv_hr(se_e, se_o, ts2, None, reflect=False)

    # SE channel attention, computed on the VPU/XLU/EUP only (this serialized
    # pool->fc1->fc2->gate chain stays off the MXU).
    lane_ch = jax.lax.broadcasted_iota(jnp.int32, (1, W2C), 1) % C
    s_sum = jnp.sum(se_e, axis=1) + jnp.sum(se_o, axis=1)          # (B, W2C)
    inv_n = 1.0 / float(H2 * W2)
    h1 = jnp.zeros((B, R), jnp.float32) + fc1b
    for c in range(C):                                             # static unroll
        pooled_c = jnp.sum(jnp.where(lane_ch == c, s_sum, 0.0),
                           axis=1, keepdims=True) * inv_n          # (B, 1)
        h1 = h1 + pooled_c * fc1w[c:c + 1, :]
    h1 = jnp.maximum(h1, 0.0)
    gate_row = jnp.zeros((B, W2C), jnp.float32)
    for c in range(C):
        g_c = jax.nn.sigmoid(
            jnp.sum(h1 * fc2wT[c:c + 1, :], axis=1, keepdims=True)
            + fc2b[:, c:c + 1])                                    # (B, 1)
        gate_row = gate_row + jnp.where(lane_ch == c, g_c, 0.0)
    gate = gate_row.reshape(B, 1, W2C)
    s_e = jnp.maximum(se_e * gate + up_e, 0.0)
    s_o = jnp.maximum(se_o * gate + up_o, 0.0)

    # --- down_conv (reflect pad, stride 2) -> +x -> (relu) ---
    # NOTE: out is W*C (=64) lanes wide -> masked stores; minor at this size.
    out = conv_dn(s_e, s_o, tdn, bdn) + x
    if with_relu:
        out = jnp.maximum(out, 0.0)
    out_ref[...] = out.astype(out_ref.dtype)


# ----------------------------------------------------------------------------
# Wrapper: build packed constants, flatten to lane-dense slabs, one pallas_call
# ----------------------------------------------------------------------------
def dual_up_down_forward(x, res, p, with_relu=True, matmul_dtype=jnp.bfloat16):
    B, H, W, C = x.shape
    H2, W2 = 2 * H, 2 * W
    WC, W2C = W * C, W2 * C
    assert H >= 2 and W >= 2, "3x3 reflect padding needs H, W >= 2"
    assert res.shape == (B, H2, W2, C), "res must be (B, 2H, 2W, C)"
    assert p["convpre_w"].shape[3] == 4 * C
    R = int(p["fc1_w"].shape[1])

    # Stacked Toeplitz weights (3 vertical taps along K; horizontal taps,
    # padding and the down-conv column stride folded in).
    t1s = stacked_toeplitz(p["conv1_w"], W, 1, "reflect")        # (3*WC, WC)
    t2s = stacked_toeplitz(p["conv2_w"], W, 1, "reflect")
    tpres = stacked_toeplitz(p["convpre_w"], W, 1, "reflect")    # (3*WC, W*4C)
    tups = stacked_toeplitz(p["up_w"], W2, 1, "reflect")         # (3*W2C, W2C)
    ts1s = stacked_toeplitz(p["se_c1_w"], W2, 1, "zero")
    ts2s = stacked_toeplitz(p["se_c2_w"], W2, 1, "zero")
    tdns = stacked_toeplitz(p["down_w"], W2, 2, "reflect")       # (3*W2C, WC)

    # Fold PixelShuffle(2) column selection into conv_pre (exact, host-side).
    v_even, v_odd = pixel_shuffle_col_select(W, C)
    tpre_eo = jnp.concatenate([jnp.dot(tpres, v_even, precision=_HI),
                               jnp.dot(tpres, v_odd, precision=_HI)], axis=1)
    bpre_full = jnp.tile(p["convpre_b"], (1, W))                 # (1, W*4C)
    bpre_eo = jnp.concatenate([jnp.dot(bpre_full, v_even, precision=_HI),
                               jnp.dot(bpre_full, v_odd, precision=_HI)], axis=1)

    # Biases tiled across output width (lane axis).
    b1 = jnp.tile(p["conv1_b"], (1, W))
    b2 = jnp.tile(p["conv2_b"], (1, W))
    bup = jnp.tile(p["up_b"], (1, W2))
    bdn = jnp.tile(p["down_b"], (1, W))                          # stride-2 width = W

    def pad128(a):
        pad = (-a.shape[1]) % 128
        return a if pad == 0 else jnp.pad(a, ((0, 0), (0, pad)))

    # Packed constant slabs (fewer DMA descriptors / less double-buffer VMEM).
    ta = jnp.concatenate([pad128(t1s), pad128(t2s), pad128(tpre_eo)],
                         axis=1).astype(matmul_dtype)
    tb = jnp.concatenate([pad128(tups), pad128(ts1s), pad128(ts2s), pad128(tdns)],
                         axis=1).astype(matmul_dtype)

    pw = _ceil128(max(2 * W2C, R))

    def padc(a):
        return jnp.pad(a, ((0, 0), (0, pw - a.shape[1])))

    pk = jnp.concatenate([
        padc(b1), padc(b2), padc(bpre_eo), padc(bup), padc(bdn),
        padc(p["fc1_w"]), padc(p["fc1_b"]),
        padc(p["fc2_w"].T), padc(p["fc2_b"]),
    ], axis=0).astype(jnp.float32)                               # (7 + 2C, pw)

    # Row-flattened activations.  res row h holds [full row 2h | full row 2h+1]
    # (a free row-major view), so the kernel gets the even/odd split for free.
    x_f = x.reshape(B, H, WC)
    res_f = res.reshape(B, H, 2 * W2C)

    kernel = functools.partial(_fused_kernel, (B, H, W, C, R), with_relu)

    out_f, resout_f = pl.pallas_call(
        kernel,
        grid=(1,),
        in_specs=[
            pl.BlockSpec((B, H, WC), lambda i: (0, 0, 0)),
            pl.BlockSpec((B, H, 2 * W2C), lambda i: (0, 0, 0)),
            pl.BlockSpec(ta.shape, lambda i: (0, 0)),
            pl.BlockSpec(tb.shape, lambda i: (0, 0)),
            pl.BlockSpec(pk.shape, lambda i: (0, 0)),
        ],
        out_specs=(pl.BlockSpec((B, H, WC), lambda i: (0, 0, 0)),
                   pl.BlockSpec((B, H, 2 * W2C), lambda i: (0, 0, 0))),
        out_shape=(jax.ShapeDtypeStruct((B, H, WC), x.dtype),
                   jax.ShapeDtypeStruct((B, H, 2 * W2C), x.dtype)),
        compiler_params=pltpu.CompilerParams(
            dimension_semantics=("arbitrary",)),
    )(x_f, res_f, ta, tb, pk)

    return out_f.reshape(B, H, W, C), resout_f.reshape(B, H2, W2, C)


# ----------------------------------------------------------------------------
# Pure-JAX reference (exact module semantics).  conv_operand_dtype=bf16 gives a
# precision-matched reference for validating the bf16-MXU kernel tightly.
# ----------------------------------------------------------------------------
def rpad(a):
    return jnp.pad(a, ((0, 0), (1, 1), (1, 1), (0, 0)), mode="reflect")


def zpad(a):
    return jnp.pad(a, ((0, 0), (1, 1), (1, 1), (0, 0)))


def pixel_shuffle_nhwc(x, r):
    B, H, W, Cr2 = x.shape
    C = Cr2 // (r * r)
    x = x.reshape(B, H, W, C, r, r)
    x = x.transpose(0, 1, 4, 2, 5, 3)
    return x.reshape(B, H * r, W * r, C)


def dual_up_down_ref(x, res, p, with_relu=True, conv_operand_dtype=jnp.float32):
    dt = conv_operand_dtype

    def conv(a, w, b=None, stride=1):
        o = jax.lax.conv_general_dilated(
            a.astype(dt), w.astype(dt), (stride, stride), "VALID",
            dimension_numbers=("NHWC", "HWIO", "NHWC"),
            precision=_HI, preferred_element_type=jnp.float32)
        if b is not None:
            o = o + b.reshape(1, 1, 1, -1)
        return o

    relu = lambda a: jnp.maximum(a, 0.0)
    x_r = x
    t = relu(conv(rpad(x), p["conv1_w"], p["conv1_b"]))
    t = relu(conv(rpad(t), p["conv2_w"], p["conv2_b"]) + x_r)
    t = conv(rpad(t), p["convpre_w"], p["convpre_b"])
    t = pixel_shuffle_nhwc(t, 2)
    t = relu(conv(rpad(t), p["up_w"], p["up_b"]) + res)
    res_out = t
    s = relu(conv(zpad(t), p["se_c1_w"]))
    s = conv(zpad(s), p["se_c2_w"])
    pooled = jnp.mean(s, axis=(1, 2))
    h = jnp.maximum(jnp.dot(pooled, p["fc1_w"], precision=_HI) + p["fc1_b"], 0.0)
    sc = jax.nn.sigmoid(jnp.dot(h, p["fc2_w"], precision=_HI) + p["fc2_b"])
    s = relu(s * sc[:, None, None, :] + t)
    out = conv(rpad(s), p["down_w"], p["down_b"], stride=2) + x_r
    if with_relu:
        out = relu(out)
    return out, res_out


# ----------------------------------------------------------------------------
# Deterministic parameter init (shapes follow DualUpDownLayer.__init__)
# ----------------------------------------------------------------------------
def init_params(key, c, reduction=32):
    ks = jax.random.split(key, 16)
    cw = lambda k, ci, co: 0.1 * jax.random.normal(k, (3, 3, ci, co), jnp.float32)
    bv = lambda k, co: 0.1 * jax.random.normal(k, (1, co), jnp.float32)
    return {
        "conv1_w": cw(ks[0], c, c),        "conv1_b": bv(ks[1], c),
        "conv2_w": cw(ks[2], c, c),        "conv2_b": bv(ks[3], c),
        "convpre_w": cw(ks[4], c, 4 * c),  "convpre_b": bv(ks[5], 4 * c),
        "up_w": cw(ks[6], c, c),           "up_b": bv(ks[7], c),
        "se_c1_w": cw(ks[8], c, c),        # conv3x3: bias=False
        "se_c2_w": cw(ks[9], c, c),        # conv3x3: bias=False
        "fc1_w": 0.1 * jax.random.normal(ks[10], (c, reduction), jnp.float32),
        "fc1_b": 0.1 * jax.random.normal(ks[11], (1, reduction), jnp.float32),
        "fc2_w": 0.1 * jax.random.normal(ks[12], (reduction, c), jnp.float32),
        "fc2_b": 0.1 * jax.random.normal(ks[13], (1, c), jnp.float32),
        "down_w": cw(ks[14], c, c),        "down_b": bv(ks[15], c),
    }


# ----------------------------------------------------------------------------
if __name__ == "__main__":
    B, C, H, W = 2, 4, 16, 16              # in_dim = out_dim = res_dim = 4
    key = jax.random.PRNGKey(0)
    kx, kr, kp = jax.random.split(key, 3)

    x = jax.random.normal(kx, (B, H, W, C), jnp.float32)             # NHWC
    res = jax.random.normal(kr, (B, 2 * H, 2 * W, C), jnp.float32)   # NHWC
    params = init_params(kp, C)

    fwd = jax.jit(functools.partial(dual_up_down_forward, with_relu=True))
    out, res_out = fwd(x, res, params)
    jax.block_until_ready((out, res_out))

    # Precision-matched reference (bf16 conv operands, f32 accumulation):
    # validates the Pallas mechanics tightly.
    out_m, res_m = dual_up_down_ref(x, res, params, True, jnp.bfloat16)
    # Full-f32 reference (exact module semantics): bound set by bf16 operand
    # rounding through a 7-conv chain.
    out_r, res_r = dual_up_down_ref(x, res, params, True, jnp.float32)

    err = lambda a, b: float(jnp.max(jnp.abs(a - b)))
    e_om, e_rm = err(out, out_m), err(res_out, res_m)
    e_or, e_rr = err(out, out_r), err(res_out, res_r)

    assert out.shape == (B, H, W, C) and res_out.shape == (B, 2 * H, 2 * W, C)
    assert e_om < 2e-2 and e_rm < 2e-2, ("matched-precision mismatch", e_om, e_rm)
    assert e_or < 6e-2 and e_rr < 6e-2, ("f32-reference mismatch", e_or, e_rr)

    print("KERNEL_OK")
</pallas_src>

<mosaic_0001>
module attributes {stable_mosaic.version = 11 : i64} {
  func.func @_fused_kernel(%arg0: i32, %arg1: memref<2x16x64xf32, #tpu.memory_space<vmem>>, %arg2: memref<2x16x256xf32, #tpu.memory_space<vmem>>, %arg3: memref<192x512xbf16, #tpu.memory_space<vmem>>, %arg4: memref<384x512xbf16, #tpu.memory_space<vmem>>, %arg5: memref<15x256xf32, #tpu.memory_space<vmem>>, %arg6: memref<2x16x64xf32, #tpu.memory_space<vmem>>, %arg7: memref<2x16x256xf32, #tpu.memory_space<vmem>>) attributes {dimension_semantics = [#tpu.dimension_semantics<arbitrary>], iteration_bounds = array<i64: 1>, scalar_prefetch = 0 : i64, scratch_operands = 0 : i64, tpu.core_type = #tpu.core_type<tc>, window_params = [{pipeline_mode = #tpu.pipeline_mode<synchronous>, transform_indices = @transform_0, window_bounds = array<i64: 2, 16, 64>}, {pipeline_mode = #tpu.pipeline_mode<synchronous>, transform_indices = @transform_1, window_bounds = array<i64: 2, 16, 256>}, {pipeline_mode = #tpu.pipeline_mode<synchronous>, transform_indices = @transform_2, window_bounds = array<i64: 192, 512>}, {pipeline_mode = #tpu.pipeline_mode<synchronous>, transform_indices = @transform_3, window_bounds = array<i64: 384, 512>}, {pipeline_mode = #tpu.pipeline_mode<synchronous>, transform_indices = @transform_4, window_bounds = array<i64: 15, 256>}, {pipeline_mode = #tpu.pipeline_mode<synchronous>, transform_indices = @transform_5, window_bounds = array<i64: 2, 16, 64>}, {pipeline_mode = #tpu.pipeline_mode<synchronous>, transform_indices = @transform_6, window_bounds = array<i64: 2, 16, 256>}]} {
    %c0 = arith.constant 0 : index
    %c0_0 = arith.constant 0 : index
    %c0_1 = arith.constant 0 : index
    %0 = vector.load %arg1[%c0, %c0_0, %c0_1] : memref<2x16x64xf32, #tpu.memory_space<vmem>>, vector<2x16x64xf32>
    %c0_2 = arith.constant 0 : index
    %c0_3 = arith.constant 0 : index
    %c0_4 = arith.constant 0 : index
    %1 = vector.load %arg2[%c0_2, %c0_3, %c0_4] : memref<2x16x256xf32, #tpu.memory_space<vmem>>, vector<2x16x128xf32>
    %c0_5 = arith.constant 0 : index
    %c0_6 = arith.constant 0 : index
    %c128 = arith.constant 128 : index
    %2 = vector.load %arg2[%c0_5, %c0_6, %c128] : memref<2x16x256xf32, #tpu.memory_space<vmem>>, vector<2x16x128xf32>
    %c0_7 = arith.constant 0 : index
    %c0_8 = arith.constant 0 : index
    %3 = vector.load %arg3[%c0_7, %c0_8] : memref<192x512xbf16, #tpu.memory_space<vmem>>, vector<192x64xbf16>
    %c0_9 = arith.constant 0 : index
    %c128_10 = arith.constant 128 : index
    %4 = vector.load %arg3[%c0_9, %c128_10] : memref<192x512xbf16, #tpu.memory_space<vmem>>, vector<192x64xbf16>
    %c0_11 = arith.constant 0 : index
    %c256 = arith.constant 256 : index
    %5 = vector.load %arg3[%c0_11, %c256] : memref<192x512xbf16, #tpu.memory_space<vmem>>, vector<192x256xbf16>
    %c0_12 = arith.constant 0 : index
    %c0_13 = arith.constant 0 : index
    %6 = vector.load %arg4[%c0_12, %c0_13] : memref<384x512xbf16, #tpu.memory_space<vmem>>, vector<384x128xbf16>
    %c0_14 = arith.constant 0 : index
    %c128_15 = arith.constant 128 : index
    %7 = vector.load %arg4[%c0_14, %c128_15] : memref<384x512xbf16, #tpu.memory_space<vmem>>, vector<384x128xbf16>
    %c0_16 = arith.constant 0 : index
    %c256_17 = arith.constant 256 : index
    %8 = vector.load %arg4[%c0_16, %c256_17] : memref<384x512xbf16, #tpu.memory_space<vmem>>, vector<384x128xbf16>
    %c0_18 = arith.constant 0 : index
    %c384 = arith.constant 384 : index
    %9 = vector.load %arg4[%c0_18, %c384] : memref<384x512xbf16, #tpu.memory_space<vmem>>, vector<384x64xbf16>
    %c0_19 = arith.constant 0 : index
    %c0_20 = arith.constant 0 : index
    %10 = vector.load %arg5[%c0_19, %c0_20] : memref<15x256xf32, #tpu.memory_space<vmem>>, vector<1x64xf32>
    %c1 = arith.constant 1 : index
    %c0_21 = arith.constant 0 : index
    %11 = vector.load %arg5[%c1, %c0_21] : memref<15x256xf32, #tpu.memory_space<vmem>>, vector<1x64xf32>
    %c2 = arith.constant 2 : index
    %c0_22 = arith.constant 0 : index
    %12 = vector.load %arg5[%c2, %c0_22] : memref<15x256xf32, #tpu.memory_space<vmem>>, vector<1x256xf32>
    %c3 = arith.constant 3 : index
    %c0_23 = arith.constant 0 : index
    %13 = vector.load %arg5[%c3, %c0_23] : memref<15x256xf32, #tpu.memory_space<vmem>>, vector<1x128xf32>
    %c4 = arith.constant 4 : index
    %c0_24 = arith.constant 0 : index
    %14 = vector.load %arg5[%c4, %c0_24] : memref<15x256xf32, #tpu.memory_space<vmem>>, vector<1x64xf32>
    %c5 = arith.constant 5 : index
    %c0_25 = arith.constant 0 : index
    %15 = vector.load %arg5[%c5, %c0_25] : memref<15x256xf32, #tpu.memory_space<vmem>>, vector<4x32xf32>
    %c9 = arith.constant 9 : index
    %c0_26 = arith.constant 0 : index
    %16 = vector.load %arg5[%c9, %c0_26] : memref<15x256xf32, #tpu.memory_space<vmem>>, vector<1x32xf32>
    %c10 = arith.constant 10 : index
    %c0_27 = arith.constant 0 : index
    %17 = vector.load %arg5[%c10, %c0_27] : memref<15x256xf32, #tpu.memory_space<vmem>>, vector<4x32xf32>
    %c14 = arith.constant 14 : index
    %c0_28 = arith.constant 0 : index
    %18 = vector.load %arg5[%c14, %c0_28] : memref<15x256xf32, #tpu.memory_space<vmem>>, vector<1x4xf32>
    %19 = arith.truncf %0 : vector<2x16x64xf32> to vector<2x16x64xbf16>
    %20 = vector.extract_strided_slice %19 {offsets = [0, 1, 0], sizes = [2, 1, 64], strides = [1, 1, 1]} : vector<2x16x64xbf16> to vector<2x1x64xbf16>
    %21 = vector.extract_strided_slice %19 {offsets = [0, 0, 0], sizes = [2, 15, 64], strides = [1, 1, 1]} : vector<2x16x64xbf16> to vector<2x15x64xbf16>
    %22 = tpu.concatenate %20, %21 in 1 : vector<2x1x64xbf16>, vector<2x15x64xbf16> -> vector<2x16x64xbf16>
    %23 = vector.extract_strided_slice %19 {offsets = [0, 14, 0], sizes = [2, 1, 64], strides = [1, 1, 1]} : vector<2x16x64xbf16> to vector<2x1x64xbf16>
    %24 = vector.extract_strided_slice %19 {offsets = [0, 1, 0], sizes = [2, 15, 64], strides = [1, 1, 1]} : vector<2x16x64xbf16> to vector<2x15x64xbf16>
    %25 = tpu.concatenate %24, %23 in 1 : vector<2x15x64xbf16>, vector<2x1x64xbf16> -> vector<2x16x64xbf16>
    %26 = tpu.concatenate %22, %19, %25 in 2 : vector<2x16x64xbf16>, vector<2x16x64xbf16>, vector<2x16x64xbf16> -> vector<2x16x192xbf16>
    %27 = vector.shape_cast %26 : vector<2x16x192xbf16> to vector<32x192xbf16>
    %cst = arith.constant dense<0.000000e+00> : vector<32x64xf32>
    %28 = tpu.matmul %27, %3, %cst {dimension_numbers = #tpu.dot_dimension_numbers<[1], [0], [0], [1], [0, 0, 1, 1], [], []>} : vector<32x192xbf16>, vector<192x64xbf16>, vector<32x64xf32> -> vector<32x64xf32>
    %29 = vector.shape_cast %28 : vector<32x64xf32> to vector<2x16x64xf32>
    %30 = vector.shape_cast %10 : vector<1x64xf32> to vector<1x1x64xf32>
    %31 = vector.broadcast %30 : vector<1x1x64xf32> to vector<2x16x64xf32>
    %32 = arith.addf %29, %31 : vector<2x16x64xf32>
    %cst_29 = arith.constant 0.000000e+00 : f32
    %33 = vector.broadcast %cst_29 : f32 to vector<2x16x64xf32>
    %34 = arith.maximumf %32, %33 : vector<2x16x64xf32>
    %35 = arith.truncf %34 : vector<2x16x64xf32> to vector<2x16x64xbf16>
    %36 = vector.extract_strided_slice %35 {offsets = [0, 1, 0], sizes = [2, 1, 64], strides = [1, 1, 1]} : vector<2x16x64xbf16> to vector<2x1x64xbf16>
    %37 = vector.extract_strided_slice %35 {offsets = [0, 0, 0], sizes = [2, 15, 64], strides = [1, 1, 1]} : vector<2x16x64xbf16> to vector<2x15x64xbf16>
    %38 = tpu.concatenate %36, %37 in 1 : vector<2x1x64xbf16>, vector<2x15x64xbf16> -> vector<2x16x64xbf16>
    %39 = vector.extract_strided_slice %35 {offsets = [0, 14, 0], sizes = [2, 1, 64], strides = [1, 1, 1]} : vector<2x16x64xbf16> to vector<2x1x64xbf16>
    %40 = vector.extract_strided_slice %35 {offsets = [0, 1, 0], sizes = [2, 15, 64], strides = [1, 1, 1]} : vector<2x16x64xbf16> to vector<2x15x64xbf16>
    %41 = tpu.concatenate %40, %39 in 1 : vector<2x15x64xbf16>, vector<2x1x64xbf16> -> vector<2x16x64xbf16>
    %42 = tpu.concatenate %38, %35, %41 in 2 : vector<2x16x64xbf16>, vector<2x16x64xbf16>, vector<2x16x64xbf16> -> vector<2x16x192xbf16>
    %43 = vector.shape_cast %42 : vector<2x16x192xbf16> to vector<32x192xbf16>
    %cst_30 = arith.constant dense<0.000000e+00> : vector<32x64xf32>
    %44 = tpu.matmul %43, %4, %cst_30 {dimension_numbers = #tpu.dot_dimension_numbers<[1], [0], [0], [1], [0, 0, 1, 1], [], []>} : vector<32x192xbf16>, vector<192x64xbf16>, vector<32x64xf32> -> vector<32x64xf32>
    %45 = vector.shape_cast %44 : vector<32x64xf32> to vector<2x16x64xf32>
    %46 = vector.shape_cast %11 : vector<1x64xf32> to vector<1x1x64xf32>
    %47 = vector.broadcast %46 : vector<1x1x64xf32> to vector<2x16x64xf32>
    %48 = arith.addf %45, %47 : vector<2x16x64xf32>
    %49 = arith.addf %48, %0 : vector<2x16x64xf32>
    %cst_31 = arith.constant 0.000000e+00 : f32
    %50 = vector.broadcast %cst_31 : f32 to vector<2x16x64xf32>
    %51 = arith.maximumf %49, %50 : vector<2x16x64xf32>
    %52 = arith.truncf %51 : vector<2x16x64xf32> to vector<2x16x64xbf16>
    %53 = vector.extract_strided_slice %52 {offsets = [0, 1, 0], sizes = [2, 1, 64], strides = [1, 1, 1]} : vector<2x16x64xbf16> to vector<2x1x64xbf16>
    %54 = vector.extract_strided_slice %52 {offsets = [0, 0, 0], sizes = [2, 15, 64], strides = [1, 1, 1]} : vector<2x16x64xbf16> to vector<2x15x64xbf16>
    %55 = tpu.concatenate %53, %54 in 1 : vector<2x1x64xbf16>, vector<2x15x64xbf16> -> vector<2x16x64xbf16>
    %56 = vector.extract_strided_slice %52 {offsets = [0, 14, 0], sizes = [2, 1, 64], strides = [1, 1, 1]} : vector<2x16x64xbf16> to vector<2x1x64xbf16>
    %57 = vector.extract_strided_slice %52 {offsets = [0, 1, 0], sizes = [2, 15, 64], strides = [1, 1, 1]} : vector<2x16x64xbf16> to vector<2x15x64xbf16>
    %58 = tpu.concatenate %57, %56 in 1 : vector<2x15x64xbf16>, vector<2x1x64xbf16> -> vector<2x16x64xbf16>
    %59 = tpu.concatenate %55, %52, %58 in 2 : vector<2x16x64xbf16>, vector<2x16x64xbf16>, vector<2x16x64xbf16> -> vector<2x16x192xbf16>
    %60 = vector.shape_cast %59 : vector<2x16x192xbf16> to vector<32x192xbf16>
    %cst_32 = arith.constant dense<0.000000e+00> : vector<32x256xf32>
    %61 = tpu.matmul %60, %5, %cst_32 {dimension_numbers = #tpu.dot_dimension_numbers<[1], [0], [0], [1], [0, 0, 1, 1], [], []>} : vector<32x192xbf16>, vector<192x256xbf16>, vector<32x256xf32> -> vector<32x256xf32>
    %62 = vector.shape_cast %61 : vector<32x256xf32> to vector<2x16x256xf32>
    %63 = vector.shape_cast %12 : vector<1x256xf32> to vector<1x1x256xf32>
    %64 = vector.broadcast %63 : vector<1x1x256xf32> to vector<2x16x256xf32>
    %65 = arith.addf %62, %64 : vector<2x16x256xf32>
    %66 = vector.extract_strided_slice %65 {offsets = [0, 0, 0], sizes = [2, 16, 128], strides = [1, 1, 1]} : vector<2x16x256xf32> to vector<2x16x128xf32>
    %67 = vector.extract_strided_slice %65 {offsets = [0, 0, 128], sizes = [2, 16, 128], strides = [1, 1, 1]} : vector<2x16x256xf32> to vector<2x16x128xf32>
    %68 = arith.truncf %66 : vector<2x16x128xf32> to vector<2x16x128xbf16>
    %69 = arith.truncf %67 : vector<2x16x128xf32> to vector<2x16x128xbf16>
    %70 = vector.extract_strided_slice %69 {offsets = [0, 0, 0], sizes = [2, 1, 128], strides = [1, 1, 1]} : vector<2x16x128xbf16> to vector<2x1x128xbf16>
    %71 = vector.extract_strided_slice %68 {offsets = [0, 15, 0], sizes = [2, 1, 128], strides = [1, 1, 1]} : vector<2x16x128xbf16> to vector<2x1x128xbf16>
    %72 = vector.extract_strided_slice %69 {offsets = [0, 0, 0], sizes = [2, 15, 128], strides = [1, 1, 1]} : vector<2x16x128xbf16> to vector<2x15x128xbf16>
    %73 = tpu.concatenate %70, %72 in 1 : vector<2x1x128xbf16>, vector<2x15x128xbf16> -> vector<2x16x128xbf16>
    %74 = tpu.concatenate %73, %68, %69 in 2 : vector<2x16x128xbf16>, vector<2x16x128xbf16>, vector<2x16x128xbf16> -> vector<2x16x384xbf16>
    %75 = vector.extract_strided_slice %68 {offsets = [0, 1, 0], sizes = [2, 15, 128], strides = [1, 1, 1]} : vector<2x16x128xbf16> to vector<2x15x128xbf16>
    %76 = tpu.concatenate %75, %71 in 1 : vector<2x15x128xbf16>, vector<2x1x128xbf16> -> vector<2x16x128xbf16>
    %77 = tpu.concatenate %68, %69, %76 in 2 : vector<2x16x128xbf16>, vector<2x16x128xbf16>, vector<2x16x128xbf16> -> vector<2x16x384xbf16>
    %78 = tpu.concatenate %74, %77 in 1 : vector<2x16x384xbf16>, vector<2x16x384xbf16> -> vector<2x32x384xbf16>
    %79 = vector.shape_cast %78 : vector<2x32x384xbf16> to vector<64x384xbf16>
    %cst_33 = arith.constant dense<0.000000e+00> : vector<64x128xf32>
    %80 = tpu.matmul %79, %6, %cst_33 {dimension_numbers = #tpu.dot_dimension_numbers<[1], [0], [0], [1], [0, 0, 1, 1], [], []>} : vector<64x384xbf16>, vector<384x128xbf16>, vector<64x128xf32> -> vector<64x128xf32>
    %81 = vector.shape_cast %80 : vector<64x128xf32> to vector<2x32x128xf32>
    %82 = vector.shape_cast %13 : vector<1x128xf32> to vector<1x1x128xf32>
    %83 = vector.broadcast %82 : vector<1x1x128xf32> to vector<2x32x128xf32>
    %84 = arith.addf %81, %83 : vector<2x32x128xf32>
    %85 = vector.extract_strided_slice %84 {offsets = [0, 0, 0], sizes = [2, 16, 128], strides = [1, 1, 1]} : vector<2x32x128xf32> to vector<2x16x128xf32>
    %86 = vector.extract_strided_slice %84 {offsets = [0, 16, 0], sizes = [2, 16, 128], strides = [1, 1, 1]} : vector<2x32x128xf32> to vector<2x16x128xf32>
    %87 = arith.addf %85, %1 : vector<2x16x128xf32>
    %cst_34 = arith.constant 0.000000e+00 : f32
    %88 = vector.broadcast %cst_34 : f32 to vector<2x16x128xf32>
    %89 = arith.maximumf %87, %88 : vector<2x16x128xf32>
    %90 = arith.addf %86, %2 : vector<2x16x128xf32>
    %cst_35 = arith.constant 0.000000e+00 : f32
    %91 = vector.broadcast %cst_35 : f32 to vector<2x16x128xf32>
    %92 = arith.maximumf %90, %91 : vector<2x16x128xf32>
    %c0_36 = arith.constant 0 : index
    %c0_37 = arith.constant 0 : index
    %c0_38 = arith.constant 0 : index
    %93 = vector.load %arg7[%c0_36, %c0_37, %c0_38] : memref<2x16x256xf32, #tpu.memory_space<vmem>>, vector<2x16x128xf32>
    tpu.vector_store %arg7[%c0_36, %c0_37, %c0_38], %89 {strides = array<i32>} : memref<2x16x256xf32, #tpu.memory_space<vmem>>, vector<2x16x128xf32>,
    %c0_39 = arith.constant 0 : index
    %c0_40 = arith.constant 0 : index
    %c128_41 = arith.constant 128 : index
    %94 = vector.load %arg7[%c0_39, %c0_40, %c128_41] : memref<2x16x256xf32, #tpu.memory_space<vmem>>, vector<2x16x128xf32>
    tpu.vector_store %arg7[%c0_39, %c0_40, %c128_41], %92 {strides = array<i32>} : memref<2x16x256xf32, #tpu.memory_space<vmem>>, vector<2x16x128xf32>,
    %95 = arith.truncf %89 : vector<2x16x128xf32> to vector<2x16x128xbf16>
    %96 = arith.truncf %92 : vector<2x16x128xf32> to vector<2x16x128xbf16>
    %cst_42 = arith.constant 0.000000e+00 : bf16
    %97 = vector.broadcast %cst_42 : bf16 to vector<2x1x128xbf16>
    %98 = vector.extract_strided_slice %96 {offsets = [0, 0, 0], sizes = [2, 15, 128], strides = [1, 1, 1]} : vector<2x16x128xbf16> to vector<2x15x128xbf16>
    %99 = tpu.concatenate %97, %98 in 1 : vector<2x1x128xbf16>, vector<2x15x128xbf16> -> vector<2x16x128xbf16>
    %100 = tpu.concatenate %99, %95, %96 in 2 : vector<2x16x128xbf16>, vector<2x16x128xbf16>, vector<2x16x128xbf16> -> vector<2x16x384xbf16>
    %cst_43 = arith.constant 0.000000e+00 : bf16
    %101 = vector.broadcast %cst_43 : bf16 to vector<2x1x128xbf16>
    %102 = vector.extract_strided_slice %95 {offsets = [0, 1, 0], sizes = [2, 15, 128], strides = [1, 1, 1]} : vector<2x16x128xbf16> to vector<2x15x128xbf16>
    %103 = tpu.concatenate %102, %101 in 1 : vector<2x15x128xbf16>, vector<2x1x128xbf16> -> vector<2x16x128xbf16>
    %104 = tpu.concatenate %95, %96, %103 in 2 : vector<2x16x128xbf16>, vector<2x16x128xbf16>, vector<2x16x128xbf16> -> vector<2x16x384xbf16>
    %105 = tpu.concatenate %100, %104 in 1 : vector<2x16x384xbf16>, vector<2x16x384xbf16> -> vector<2x32x384xbf16>
    %106 = vector.shape_cast %105 : vector<2x32x384xbf16> to vector<64x384xbf16>
    %cst_44 = arith.constant dense<0.000000e+00> : vector<64x128xf32>
    %107 = tpu.matmul %106, %7, %cst_44 {dimension_numbers = #tpu.dot_dimension_numbers<[1], [0], [0], [1], [0, 0, 1, 1], [], []>} : vector<64x384xbf16>, vector<384x128xbf16>, vector<64x128xf32> -> vector<64x128xf32>
    %108 = vector.shape_cast %107 : vector<64x128xf32> to vector<2x32x128xf32>
    %109 = vector.extract_strided_slice %108 {offsets = [0, 0, 0], sizes = [2, 16, 128], strides = [1, 1, 1]} : vector<2x32x128xf32> to vector<2x16x128xf32>
    %110 = vector.extract_strided_slice %108 {offsets = [0, 16, 0], sizes = [2, 16, 128], strides = [1, 1, 1]} : vector<2x32x128xf32> to vector<2x16x128xf32>
    %cst_45 = arith.constant 0.000000e+00 : f32
    %111 = vector.broadcast %cst_45 : f32 to vector<2x16x128xf32>
    %112 = arith.maximumf %109, %111 : vector<2x16x128xf32>
    %cst_46 = arith.constant 0.000000e+00 : f32
    %113 = vector.broadcast %cst_46 : f32 to vector<2x16x128xf32>
    %114 = arith.maximumf %110, %113 : vector<2x16x128xf32>
    %115 = arith.truncf %112 : vector<2x16x128xf32> to vector<2x16x128xbf16>
    %116 = arith.truncf %114 : vector<2x16x128xf32> to vector<2x16x128xbf16>
    %cst_47 = arith.constant 0.000000e+00 : bf16
    %117 = vector.broadcast %cst_47 : bf16 to vector<2x1x128xbf16>
    %118 = vector.extract_strided_slice %116 {offsets = [0, 0, 0], sizes = [2, 15, 128], strides = [1, 1, 1]} : vector<2x16x128xbf16> to vector<2x15x128xbf16>
    %119 = tpu.concatenate %117, %118 in 1 : vector<2x1x128xbf16>, vector<2x15x128xbf16> -> vector<2x16x128xbf16>
    %120 = tpu.concatenate %119, %115, %116 in 2 : vector<2x16x128xbf16>, vector<2x16x128xbf16>, vector<2x16x128xbf16> -> vector<2x16x384xbf16>
    %cst_48 = arith.constant 0.000000e+00 : bf16
    %121 = vector.broadcast %cst_48 : bf16 to vector<2x1x128xbf16>
    %122 = vector.extract_strided_slice %115 {offsets = [0, 1, 0], sizes = [2, 15, 128], strides = [1, 1, 1]} : vector<2x16x128xbf16> to vector<2x15x128xbf16>
    %123 = tpu.concatenate %122, %121 in 1 : vector<2x15x128xbf16>, vector<2x1x128xbf16> -> vector<2x16x128xbf16>
    %124 = tpu.concatenate %115, %116, %123 in 2 : vector<2x16x128xbf16>, vector<2x16x128xbf16>, vector<2x16x128xbf16> -> vector<2x16x384xbf16>
    %125 = tpu.concatenate %120, %124 in 1 : vector<2x16x384xbf16>, vector<2x16x384xbf16> -> vector<2x32x384xbf16>
    %126 = vector.shape_cast %125 : vector<2x32x384xbf16> to vector<64x384xbf16>
    %cst_49 = arith.constant dense<0.000000e+00> : vector<64x128xf32>
    %127 = tpu.matmul %126, %8, %cst_49 {dimension_numbers = #tpu.dot_dimension_numbers<[1], [0], [0], [1], [0, 0, 1, 1], [], []>} : vector<64x384xbf16>, vector<384x128xbf16>, vector<64x128xf32> -> vector<64x128xf32>
    %128 = vector.shape_cast %127 : vector<64x128xf32> to vector<2x32x128xf32>
    %129 = vector.extract_strided_slice %128 {offsets = [0, 0, 0], sizes = [2, 16, 128], strides = [1, 1, 1]} : vector<2x32x128xf32> to vector<2x16x128xf32>
    %130 = vector.extract_strided_slice %128 {offsets = [0, 16, 0], sizes = [2, 16, 128], strides = [1, 1, 1]} : vector<2x32x128xf32> to vector<2x16x128xf32>
    %131 = tpu.iota {dimensions = array<i32: 1>} : vector<1x128xi32>
    %c4_i32 = arith.constant 4 : i32
    %c0_i32 = arith.constant 0 : i32
    %132 = arith.cmpi eq, %c4_i32, %c0_i32 : i32
    %c1_i32 = arith.constant 1 : i32
    %133 = arith.select %132, %c1_i32, %c4_i32 : i32
    %134 = vector.broadcast %133 : i32 to vector<1x128xi32>
    %135 = arith.remsi %131, %134 : vector<1x128xi32>
    %c0_i32_50 = arith.constant 0 : i32
    %136 = vector.broadcast %c0_i32_50 : i32 to vector<1x128xi32>
    %137 = arith.cmpi ne, %135, %136 : vector<1x128xi32>
    %c0_i32_51 = arith.constant 0 : i32
    %138 = vector.broadcast %c0_i32_51 : i32 to vector<1x128xi32>
    %139 = arith.cmpi slt, %135, %138 : vector<1x128xi32>
    %c0_i32_52 = arith.constant 0 : i32
    %140 = arith.cmpi slt, %133, %c0_i32_52 : i32
    %141 = vector.broadcast %140 : i1 to vector<1x128xi1>
    %142 = vector.broadcast %141 : vector<1x128xi1> to vector<1x128xi1>
    %143 = arith.xori %139, %142 : vector<1x128xi1>
    %144 = arith.andi %143, %137 : vector<1x128xi1>
    %145 = vector.broadcast %133 : i32 to vector<1x128xi32>
    %146 = arith.addi %135, %145 : vector<1x128xi32>
    %147 = arith.select %144, %146, %135 : vector<1x128xi1>, vector<1x128xi32>
    %cst_53 = arith.constant dense<0.000000e+00> : vector<2x128xf32>
    %148 = vector.multi_reduction <add>, %129, %cst_53 [1] : vector<2x16x128xf32> to vector<2x128xf32>
    %cst_54 = arith.constant dense<0.000000e+00> : vector<2x128xf32>
    %149 = vector.multi_reduction <add>, %130, %cst_54 [1] : vector<2x16x128xf32> to vector<2x128xf32>
    %150 = arith.addf %148, %149 : vector<2x128xf32>
    %cst_55 = arith.constant 0.000000e+00 : f32
    %151 = vector.broadcast %cst_55 : f32 to vector<2x32xf32>
    %152 = vector.broadcast %16 : vector<1x32xf32> to vector<2x32xf32>
    %153 = arith.addf %151, %152 : vector<2x32xf32>
    %c0_i32_56 = arith.constant 0 : i32
    %154 = vector.broadcast %c0_i32_56 : i32 to vector<1x128xi32>
    %155 = arith.cmpi eq, %147, %154 : vector<1x128xi32>
    %cst_57 = arith.constant 0.000000e+00 : f32
    %156 = vector.shape_cast %155 : vector<1x128xi1> to vector<1x128xi1>
    %157 = vector.broadcast %156 : vector<1x128xi1> to vector<2x128xi1>
    %158 = vector.broadcast %cst_57 : f32 to vector<2x128xf32>
    %159 = arith.select %157, %150, %158 : vector<2x128xi1>, vector<2x128xf32>
    %cst_58 = arith.constant dense<0.000000e+00> : vector<2xf32>
    %160 = vector.multi_reduction <add>, %159, %cst_58 [1] : vector<2x128xf32> to vector<2xf32>
    %161 = vector.shape_cast %160 : vector<2xf32> to vector<2x1xf32>
    %cst_59 = arith.constant 9.765625E-4 : f32
    %162 = vector.broadcast %cst_59 : f32 to vector<2x1xf32>
    %163 = arith.mulf %161, %162 : vector<2x1xf32>
    %164 = vector.extract_strided_slice %15 {offsets = [0, 0], sizes = [1, 32], strides = [1, 1]} : vector<4x32xf32> to vector<1x32xf32>
    %165 = vector.broadcast %163 : vector<2x1xf32> to vector<2x32xf32>
    %166 = vector.broadcast %164 : vector<1x32xf32> to vector<2x32xf32>
    %167 = arith.mulf %165, %166 : vector<2x32xf32>
    %168 = arith.addf %153, %167 : vector<2x32xf32>
    %c1_i32_60 = arith.constant 1 : i32
    %169 = vector.broadcast %c1_i32_60 : i32 to vector<1x128xi32>
    %170 = arith.cmpi eq, %147, %169 : vector<1x128xi32>
    %cst_61 = arith.constant 0.000000e+00 : f32
    %171 = vector.shape_cast %170 : vector<1x128xi1> to vector<1x128xi1>
    %172 = vector.broadcast %171 : vector<1x128xi1> to vector<2x128xi1>
    %173 = vector.broadcast %cst_61 : f32 to vector<2x128xf32>
    %174 = arith.select %172, %150, %173 : vector<2x128xi1>, vector<2x128xf32>
    %cst_62 = arith.constant dense<0.000000e+00> : vector<2xf32>
    %175 = vector.multi_reduction <add>, %174, %cst_62 [1] : vector<2x128xf32> to vector<2xf32>
    %176 = vector.shape_cast %175 : vector<2xf32> to vector<2x1xf32>
    %cst_63 = arith.constant 9.765625E-4 : f32
    %177 = vector.broadcast %cst_63 : f32 to vector<2x1xf32>
    %178 = arith.mulf %176, %177 : vector<2x1xf32>
    %179 = vector.extract_strided_slice %15 {offsets = [1, 0], sizes = [1, 32], strides = [1, 1]} : vector<4x32xf32> to vector<1x32xf32>
    %180 = vector.broadcast %178 : vector<2x1xf32> to vector<2x32xf32>
    %181 = vector.broadcast %179 : vector<1x32xf32> to vector<2x32xf32>
    %182 = arith.mulf %180, %181 : vector<2x32xf32>
    %183 = arith.addf %168, %182 : vector<2x32xf32>
    %c2_i32 = arith.constant 2 : i32
    %184 = vector.broadcast %c2_i32 : i32 to vector<1x128xi32>
    %185 = arith.cmpi eq, %147, %184 : vector<1x128xi32>
    %cst_64 = arith.constant 0.000000e+00 : f32
    %186 = vector.shape_cast %185 : vector<1x128xi1> to vector<1x128xi1>
    %187 = vector.broadcast %186 : vector<1x128xi1> to vector<2x128xi1>
    %188 = vector.broadcast %cst_64 : f32 to vector<2x128xf32>
    %189 = arith.select %187, %150, %188 : vector<2x128xi1>, vector<2x128xf32>
    %cst_65 = arith.constant dense<0.000000e+00> : vector<2xf32>
    %190 = vector.multi_reduction <add>, %189, %cst_65 [1] : vector<2x128xf32> to vector<2xf32>
    %191 = vector.shape_cast %190 : vector<2xf32> to vector<2x1xf32>
    %cst_66 = arith.constant 9.765625E-4 : f32
    %192 = vector.broadcast %cst_66 : f32 to vector<2x1xf32>
    %193 = arith.mulf %191, %192 : vector<2x1xf32>
    %194 = vector.extract_strided_slice %15 {offsets = [2, 0], sizes = [1, 32], strides = [1, 1]} : vector<4x32xf32> to vector<1x32xf32>
    %195 = vector.broadcast %193 : vector<2x1xf32> to vector<2x32xf32>
    %196 = vector.broadcast %194 : vector<1x32xf32> to vector<2x32xf32>
    %197 = arith.mulf %195, %196 : vector<2x32xf32>
    %198 = arith.addf %183, %197 : vector<2x32xf32>
    %c3_i32 = arith.constant 3 : i32
    %199 = vector.broadcast %c3_i32 : i32 to vector<1x128xi32>
    %200 = arith.cmpi eq, %147, %199 : vector<1x128xi32>
    %cst_67 = arith.constant 0.000000e+00 : f32
    %201 = vector.shape_cast %200 : vector<1x128xi1> to vector<1x128xi1>
    %202 = vector.broadcast %201 : vector<1x128xi1> to vector<2x128xi1>
    %203 = vector.broadcast %cst_67 : f32 to vector<2x128xf32>
    %204 = arith.select %202, %150, %203 : vector<2x128xi1>, vector<2x128xf32>
    %cst_68 = arith.constant dense<0.000000e+00> : vector<2xf32>
    %205 = vector.multi_reduction <add>, %204, %cst_68 [1] : vector<2x128xf32> to vector<2xf32>
    %206 = vector.shape_cast %205 : vector<2xf32> to vector<2x1xf32>
    %cst_69 = arith.constant 9.765625E-4 : f32
    %207 = vector.broadcast %cst_69 : f32 to vector<2x1xf32>
    %208 = arith.mulf %206, %207 : vector<2x1xf32>
    %209 = vector.extract_strided_slice %15 {offsets = [3, 0], sizes = [1, 32], strides = [1, 1]} : vector<4x32xf32> to vector<1x32xf32>
    %210 = vector.broadcast %208 : vector<2x1xf32> to vector<2x32xf32>
    %211 = vector.broadcast %209 : vector<1x32xf32> to vector<2x32xf32>
    %212 = arith.mulf %210, %211 : vector<2x32xf32>
    %213 = arith.addf %198, %212 : vector<2x32xf32>
    %cst_70 = arith.constant 0.000000e+00 : f32
    %214 = vector.broadcast %cst_70 : f32 to vector<2x32xf32>
    %215 = arith.maximumf %213, %214 : vector<2x32xf32>
    %cst_71 = arith.constant 0.000000e+00 : f32
    %216 = vector.broadcast %cst_71 : f32 to vector<2x128xf32>
    %217 = vector.extract_strided_slice %17 {offsets = [0, 0], sizes = [1, 32], strides = [1, 1]} : vector<4x32xf32> to vector<1x32xf32>
    %218 = vector.broadcast %217 : vector<1x32xf32> to vector<2x32xf32>
    %219 = arith.mulf %215, %218 : vector<2x32xf32>
    %cst_72 = arith.constant dense<0.000000e+00> : vector<2xf32>
    %220 = vector.multi_reduction <add>, %219, %cst_72 [1] : vector<2x32xf32> to vector<2xf32>
    %221 = vector.shape_cast %220 : vector<2xf32> to vector<2x1xf32>
    %222 = vector.extract_strided_slice %18 {offsets = [0, 0], sizes = [1, 1], strides = [1, 1]} : vector<1x4xf32> to vector<1x1xf32>
    %223 = vector.broadcast %222 : vector<1x1xf32> to vector<2x1xf32>
    %224 = arith.addf %221, %223 : vector<2x1xf32>
    %225 = arith.negf %224 : vector<2x1xf32>
    %226 = math.exp %225 : vector<2x1xf32>
    %cst_73 = arith.constant 1.000000e+00 : f32
    %227 = vector.broadcast %cst_73 : f32 to vector<2x1xf32>
    %228 = arith.addf %227, %226 : vector<2x1xf32>
    %229 = arith.divf %227, %228 : vector<2x1xf32>
    %c0_i32_74 = arith.constant 0 : i32
    %230 = vector.broadcast %c0_i32_74 : i32 to vector<1x128xi32>
    %231 = arith.cmpi eq, %147, %230 : vector<1x128xi32>
    %cst_75 = arith.constant 0.000000e+00 : f32
    %232 = vector.shape_cast %231 : vector<1x128xi1> to vector<1x128xi1>
    %233 = vector.broadcast %232 : vector<1x128xi1> to vector<2x128xi1>
    %234 = vector.shape_cast %229 : vector<2x1xf32> to vector<2x1xf32>
    %235 = vector.broadcast %234 : vector<2x1xf32> to vector<2x128xf32>
    %236 = vector.broadcast %cst_75 : f32 to vector<2x128xf32>
    %237 = arith.select %233, %235, %236 : vector<2x128xi1>, vector<2x128xf32>
    %238 = arith.addf %216, %237 : vector<2x128xf32>
    %239 = vector.extract_strided_slice %17 {offsets = [1, 0], sizes = [1, 32], strides = [1, 1]} : vector<4x32xf32> to vector<1x32xf32>
    %240 = vector.broadcast %239 : vector<1x32xf32> to vector<2x32xf32>
    %241 = arith.mulf %215, %240 : vector<2x32xf32>
    %cst_76 = arith.constant dense<0.000000e+00> : vector<2xf32>
    %242 = vector.multi_reduction <add>, %241, %cst_76 [1] : vector<2x32xf32> to vector<2xf32>
    %243 = vector.shape_cast %242 : vector<2xf32> to vector<2x1xf32>
    %244 = vector.extract_strided_slice %18 {offsets = [0, 1], sizes = [1, 1], strides = [1, 1]} : vector<1x4xf32> to vector<1x1xf32>
    %245 = vector.broadcast %244 : vector<1x1xf32> to vector<2x1xf32>
    %246 = arith.addf %243, %245 : vector<2x1xf32>
    %247 = arith.negf %246 : vector<2x1xf32>
    %248 = math.exp %247 : vector<2x1xf32>
    %cst_77 = arith.constant 1.000000e+00 : f32
    %249 = vector.broadcast %cst_77 : f32 to vector<2x1xf32>
    %250 = arith.addf %249, %248 : vector<2x1xf32>
    %251 = arith.divf %249, %250 : vector<2x1xf32>
    %c1_i32_78 = arith.constant 1 : i32
    %252 = vector.broadcast %c1_i32_78 : i32 to vector<1x128xi32>
    %253 = arith.cmpi eq, %147, %252 : vector<1x128xi32>
    %cst_79 = arith.constant 0.000000e+00 : f32
    %254 = vector.shape_cast %253 : vector<1x128xi1> to vector<1x128xi1>
    %255 = vector.broadcast %254 : vector<1x128xi1> to vector<2x128xi1>
    %256 = vector.shape_cast %251 : vector<2x1xf32> to vector<2x1xf32>
    %257 = vector.broadcast %256 : vector<2x1xf32> to vector<2x128xf32>
    %258 = vector.broadcast %cst_79 : f32 to vector<2x128xf32>
    %259 = arith.select %255, %257, %258 : vector<2x128xi1>, vector<2x128xf32>
    %260 = arith.addf %238, %259 : vector<2x128xf32>
    %261 = vector.extract_strided_slice %17 {offsets = [2, 0], sizes = [1, 32], strides = [1, 1]} : vector<4x32xf32> to vector<1x32xf32>
    %262 = vector.broadcast %261 : vector<1x32xf32> to vector<2x32xf32>
    %263 = arith.mulf %215, %262 : vector<2x32xf32>
    %cst_80 = arith.constant dense<0.000000e+00> : vector<2xf32>
    %264 = vector.multi_reduction <add>, %263, %cst_80 [1] : vector<2x32xf32> to vector<2xf32>
    %265 = vector.shape_cast %264 : vector<2xf32> to vector<2x1xf32>
    %266 = vector.extract_strided_slice %18 {offsets = [0, 2], sizes = [1, 1], strides = [1, 1]} : vector<1x4xf32> to vector<1x1xf32>
    %267 = vector.broadcast %266 : vector<1x1xf32> to vector<2x1xf32>
    %268 = arith.addf %265, %267 : vector<2x1xf32>
    %269 = arith.negf %268 : vector<2x1xf32>
    %270 = math.exp %269 : vector<2x1xf32>
    %cst_81 = arith.constant 1.000000e+00 : f32
    %271 = vector.broadcast %cst_81 : f32 to vector<2x1xf32>
    %272 = arith.addf %271, %270 : vector<2x1xf32>
    %273 = arith.divf %271, %272 : vector<2x1xf32>
    %c2_i32_82 = arith.constant 2 : i32
    %274 = vector.broadcast %c2_i32_82 : i32 to vector<1x128xi32>
    %275 = arith.cmpi eq, %147, %274 : vector<1x128xi32>
    %cst_83 = arith.constant 0.000000e+00 : f32
    %276 = vector.shape_cast %275 : vector<1x128xi1> to vector<1x128xi1>
    %277 = vector.broadcast %276 : vector<1x128xi1> to vector<2x128xi1>
    %278 = vector.shape_cast %273 : vector<2x1xf32> to vector<2x1xf32>
    %279 = vector.broadcast %278 : vector<2x1xf32> to vector<2x128xf32>
    %280 = vector.broadcast %cst_83 : f32 to vector<2x128xf32>
    %281 = arith.select %277, %279, %280 : vector<2x128xi1>, vector<2x128xf32>
    %282 = arith.addf %260, %281 : vector<2x128xf32>
    %283 = vector.extract_strided_slice %17 {offsets = [3, 0], sizes = [1, 32], strides = [1, 1]} : vector<4x32xf32> to vector<1x32xf32>
    %284 = vector.broadcast %283 : vector<1x32xf32> to vector<2x32xf32>
    %285 = arith.mulf %215, %284 : vector<2x32xf32>
    %cst_84 = arith.constant dense<0.000000e+00> : vector<2xf32>
    %286 = vector.multi_reduction <add>, %285, %cst_84 [1] : vector<2x32xf32> to vector<2xf32>
    %287 = vector.shape_cast %286 : vector<2xf32> to vector<2x1xf32>
    %288 = vector.extract_strided_slice %18 {offsets = [0, 3], sizes = [1, 1], strides = [1, 1]} : vector<1x4xf32> to vector<1x1xf32>
    %289 = vector.broadcast %288 : vector<1x1xf32> to vector<2x1xf32>
    %290 = arith.addf %287, %289 : vector<2x1xf32>
    %291 = arith.negf %290 : vector<2x1xf32>
    %292 = math.exp %291 : vector<2x1xf32>
    %cst_85 = arith.constant 1.000000e+00 : f32
    %293 = vector.broadcast %cst_85 : f32 to vector<2x1xf32>
    %294 = arith.addf %293, %292 : vector<2x1xf32>
    %295 = arith.divf %293, %294 : vector<2x1xf32>
    %c3_i32_86 = arith.constant 3 : i32
    %296 = vector.broadcast %c3_i32_86 : i32 to vector<1x128xi32>
    %297 = arith.cmpi eq, %147, %296 : vector<1x128xi32>
    %cst_87 = arith.constant 0.000000e+00 : f32
    %298 = vector.shape_cast %297 : vector<1x128xi1> to vector<1x128xi1>
    %299 = vector.broadcast %298 : vector<1x128xi1> to vector<2x128xi1>
    %300 = vector.shape_cast %295 : vector<2x1xf32> to vector<2x1xf32>
    %301 = vector.broadcast %300 : vector<2x1xf32> to vector<2x128xf32>
    %302 = vector.broadcast %cst_87 : f32 to vector<2x128xf32>
    %303 = arith.select %299, %301, %302 : vector<2x128xi1>, vector<2x128xf32>
    %304 = arith.addf %282, %303 : vector<2x128xf32>
    %305 = vector.shape_cast %304 : vector<2x128xf32> to vector<2x1x128xf32>
    %306 = vector.broadcast %305 : vector<2x1x128xf32> to vector<2x16x128xf32>
    %307 = arith.mulf %129, %306 : vector<2x16x128xf32>
    %308 = arith.addf %307, %89 : vector<2x16x128xf32>
    %cst_88 = arith.constant 0.000000e+00 : f32
    %309 = vector.broadcast %cst_88 : f32 to vector<2x16x128xf32>
    %310 = arith.maximumf %308, %309 : vector<2x16x128xf32>
    %311 = vector.broadcast %305 : vector<2x1x128xf32> to vector<2x16x128xf32>
    %312 = arith.mulf %130, %311 : vector<2x16x128xf32>
    %313 = arith.addf %312, %92 : vector<2x16x128xf32>
    %cst_89 = arith.constant 0.000000e+00 : f32
    %314 = vector.broadcast %cst_89 : f32 to vector<2x16x128xf32>
    %315 = arith.maximumf %313, %314 : vector<2x16x128xf32>
    %316 = arith.truncf %310 : vector<2x16x128xf32> to vector<2x16x128xbf16>
    %317 = arith.truncf %315 : vector<2x16x128xf32> to vector<2x16x128xbf16>
    %318 = vector.extract_strided_slice %317 {offsets = [0, 0, 0], sizes = [2, 1, 128], strides = [1, 1, 1]} : vector<2x16x128xbf16> to vector<2x1x128xbf16>
    %319 = vector.extract_strided_slice %317 {offsets = [0, 0, 0], sizes = [2, 15, 128], strides = [1, 1, 1]} : vector<2x16x128xbf16> to vector<2x15x128xbf16>
    %320 = tpu.concatenate %318, %319 in 1 : vector<2x1x128xbf16>, vector<2x15x128xbf16> -> vector<2x16x128xbf16>
    %321 = tpu.concatenate %320, %316, %317 in 2 : vector<2x16x128xbf16>, vector<2x16x128xbf16>, vector<2x16x128xbf16> -> vector<2x16x384xbf16>
    %322 = vector.shape_cast %321 : vector<2x16x384xbf16> to vector<32x384xbf16>
    %cst_90 = arith.constant dense<0.000000e+00> : vector<32x64xf32>
    %323 = tpu.matmul %322, %9, %cst_90 {dimension_numbers = #tpu.dot_dimension_numbers<[1], [0], [0], [1], [0, 0, 1, 1], [], []>} : vector<32x384xbf16>, vector<384x64xbf16>, vector<32x64xf32> -> vector<32x64xf32>
    %324 = vector.shape_cast %323 : vector<32x64xf32> to vector<2x16x64xf32>
    %325 = vector.shape_cast %14 : vector<1x64xf32> to vector<1x1x64xf32>
    %326 = vector.broadcast %325 : vector<1x1x64xf32> to vector<2x16x64xf32>
    %327 = arith.addf %324, %326 : vector<2x16x64xf32>
    %328 = arith.addf %327, %0 : vector<2x16x64xf32>
    %cst_91 = arith.constant 0.000000e+00 : f32
    %329 = vector.broadcast %cst_91 : f32 to vector<2x16x64xf32>
    %330 = arith.maximumf %328, %329 : vector<2x16x64xf32>
    %c0_92 = arith.constant 0 : index
    %c0_93 = arith.constant 0 : index
    %c0_94 = arith.constant 0 : index
    %331 = vector.load %arg6[%c0_92, %c0_93, %c0_94] : memref<2x16x64xf32, #tpu.memory_space<vmem>>, vector<2x16x64xf32>
    tpu.vector_store %arg6[%c0_92, %c0_93, %c0_94], %330 {strides = array<i32>} : memref<2x16x64xf32, #tpu.memory_space<vmem>>, vector<2x16x64xf32>,
    return
  }
  func.func @transform_0(%arg0: i32) -> (i32, i32, i32) {
    %c0_i32 = arith.constant 0 : i32
    %c0_i32_0 = arith.constant 0 : i32
    %c0_i32_1 = arith.constant 0 : i32
    %c0_i32_2 = arith.constant 0 : i32
    return %c0_i32, %c0_i32_0, %c0_i32_1 : i32, i32, i32
  }
  func.func @transform_1(%arg0: i32) -> (i32, i32, i32) {
    %c0_i32 = arith.constant 0 : i32
    %c0_i32_0 = arith.constant 0 : i32
    %c0_i32_1 = arith.constant 0 : i32
    %c0_i32_2 = arith.constant 0 : i32
    return %c0_i32, %c0_i32_0, %c0_i32_1 : i32, i32, i32
  }
  func.func @transform_2(%arg0: i32) -> (i32, i32) {
    %c0_i32 = arith.constant 0 : i32
    %c0_i32_0 = arith.constant 0 : i32
    %c0_i32_1 = arith.constant 0 : i32
    return %c0_i32, %c0_i32_0 : i32, i32
  }
  func.func @transform_3(%arg0: i32) -> (i32, i32) {
    %c0_i32 = arith.constant 0 : i32
    %c0_i32_0 = arith.constant 0 : i32
    %c0_i32_1 = arith.constant 0 : i32
    return %c0_i32, %c0_i32_0 : i32, i32
  }
  func.func @transform_4(%arg0: i32) -> (i32, i32) {
    %c0_i32 = arith.constant 0 : i32
    %c0_i32_0 = arith.constant 0 : i32
    %c0_i32_1 = arith.constant 0 : i32
    return %c0_i32, %c0_i32_0 : i32, i32
  }
  func.func @transform_5(%arg0: i32) -> (i32, i32, i32) {
    %c0_i32 = arith.constant 0 : i32
    %c0_i32_0 = arith.constant 0 : i32
    %c0_i32_1 = arith.constant 0 : i32
    %c0_i32_2 = arith.constant 0 : i32
    return %c0_i32, %c0_i32_0, %c0_i32_1 : i32, i32, i32
  }
  func.func @transform_6(%arg0: i32) -> (i32, i32, i32) {
    %c0_i32 = arith.constant 0 : i32
    %c0_i32_0 = arith.constant 0 : i32
    %c0_i32_1 = arith.constant 0 : i32
    %c0_i32_2 = arith.constant 0 : i32
    return %c0_i32, %c0_i32_0, %c0_i32_1 : i32, i32, i32
  }
}

</mosaic_0001>

<llo_original>
// kernel: dual_up_down_forward.1
$region0: #{dual_up_down_forward.1}
  #allocation0 [shape = 'u32[]', space=smem, size = 0x4, offset = 0x4, fixed_abs, tag = 'smem constant byte address 0x4 - core index']
  #allocation1 [shape = 'u32[144,128]{1,0:T(1,128)}', space=vmem, size = 0x12000, scoped, tag = 'internal scratch']
  %s0 = inlined_call_operand.vmem [shape: f32[2,16,64], index: 0, kind: input, shape index: {}]
  %s1 = inlined_call_operand.vmem [shape: f32[2,16,256], index: 1, kind: input, shape index: {}]
  %s2 = inlined_call_operand.vmem [shape: bf16[192,512], index: 2, kind: input, shape index: {}]
  %s3 = inlined_call_operand.vmem [shape: bf16[384,512], index: 3, kind: input, shape index: {}]
  %s4 = inlined_call_operand.vmem [shape: f32[15,256], index: 4, kind: input, shape index: {}]
  %s5 = inlined_call_operand.vmem [shape: f32[2,16,64], index: 5, kind: output, shape index: {0}]
  %s6 = inlined_call_operand.vmem [shape: f32[2,16,256], index: 6, kind: output, shape index: {1}]
  %7 = xla_tuple %s5, %s6
  %s8 = sld [smem:[#allocation0]]
  $region38: #{dual_up_down_forward.1} parent=0
    _
  %s10 = ssub.s32 1, %s8
  %s11 = scalar_select 0, %s10, %s8
  // Predicated region
  $region2: #{dual_up_down_forward.1} parent=0 // pred_check
    _
  $region3: #{dual_up_down_forward.1} parent=0 // pred_check_branch
    %13 = sbr.rel (0) target = $region5
  $region4: #{dual_up_down_forward.1} parent=0 // pred_region
    _
  $region5: #{dual_up_down_forward.1} parent=0 // pred_fallthru
    _
  // Predicated region
  $region6: #{dual_up_down_forward.1} parent=0 // pred_check
    _
  $region7: #{dual_up_down_forward.1} parent=0 // pred_check_branch
    %15 = sbr.rel (0) target = $region9
  $region8: #{dual_up_down_forward.1} parent=0 // pred_region
    _
  $region9: #{dual_up_down_forward.1} parent=0 // pred_fallthru
    _
  // Predicated region
  $region10: #{dual_up_down_forward.1} parent=0 // pred_check
    _
  $region11: #{dual_up_down_forward.1} parent=0 // pred_check_branch
    %17 = sbr.rel (0) target = $region13
  $region12: #{dual_up_down_forward.1} parent=0 // pred_region
    _
  $region13: #{dual_up_down_forward.1} parent=0 // pred_fallthru
    _
  // Predicated region
  $region14: #{dual_up_down_forward.1} parent=0 // pred_check
    _
  $region15: #{dual_up_down_forward.1} parent=0 // pred_check_branch
    %19 = sbr.rel (0) target = $region17
  $region16: #{dual_up_down_forward.1} parent=0 // pred_region
    _
  $region17: #{dual_up_down_forward.1} parent=0 // pred_fallthru
    _
  // Predicated region
  $region18: #{dual_up_down_forward.1} parent=0 // pred_check
    _
  $region19: #{dual_up_down_forward.1} parent=0 // pred_check_branch
    %21 = sbr.rel (0) target = $region21
  $region20: #{dual_up_down_forward.1} parent=0 // pred_region
    _
  $region21: #{dual_up_down_forward.1} parent=0 // pred_fallthru
    _
  %v23 = vld [vmem:[%s0] sm:$0xff]
  %v24 = vld [vmem:[%s0 + $0x8] sm:$0xff]
  %v25 = vld [vmem:[%s0 + $0x10] sm:$0xff]
  %v26 = vld [vmem:[%s0 + $0x18] sm:$0xff]
  %v27 = vld [vmem:[%s1] sm:$0xff]
  %v28 = vld [vmem:[%s1 + $0x10] sm:$0xff]
  %v29 = vld [vmem:[%s1 + $0x20] sm:$0xff]
  %v30 = vld [vmem:[%s1 + $0x30] sm:$0xff]
  %v31 = vld [vmem:[%s1 + $0x8] sm:$0xff]
  %v32 = vld [vmem:[%s1 + $0x18] sm:$0xff]
  %v33 = vld [vmem:[%s1 + $0x28] sm:$0xff]
  %v34 = vld [vmem:[%s1 + $0x38] sm:$0xff]
  %v35 = vld [vmem:[%s2] sm:$0xf]
  %v36 = vld [vmem:[%s2 + $0x10] sm:$0xf]
  %v37 = vld [vmem:[%s2 + $0x20] sm:$0xf]
  %v38 = vld [vmem:[%s2 + $0x30] sm:$0xf]
  %v39 = vld [vmem:[%s2 + $0x40] sm:$0xf]
  %v40 = vld [vmem:[%s2 + $0x50] sm:$0xf]
  %v41 = vld [vmem:[%s2 + $0x60] sm:$0xf]
  %v42 = vld [vmem:[%s2 + $0x70] sm:$0xf]
  %v43 = vld [vmem:[%s2 + $0x80] sm:$0xf]
  %v44 = vld [vmem:[%s2 + $0x90] sm:$0xf]
  %v45 = vld [vmem:[%s2 + $0xa0] sm:$0xf]
  %v46 = vld [vmem:[%s2 + $0xb0] sm:$0xf]
  %v47 = vld [vmem:[%s2 + $0xc0] sm:$0xf]
  %v48 = vld [vmem:[%s2 + $0xd0] sm:$0xf]
  %v49 = vld [vmem:[%s2 + $0xe0] sm:$0xf]
  %v50 = vld [vmem:[%s2 + $0xf0] sm:$0xf]
  %v51 = vld [vmem:[%s2 + $0x100] sm:$0xf]
  %v52 = vld [vmem:[%s2 + $0x110] sm:$0xf]
  %v53 = vld [vmem:[%s2 + $0x120] sm:$0xf]
  %v54 = vld [vmem:[%s2 + $0x130] sm:$0xf]
  %v55 = vld [vmem:[%s2 + $0x140] sm:$0xf]
  %v56 = vld [vmem:[%s2 + $0x150] sm:$0xf]
  %v57 = vld [vmem:[%s2 + $0x160] sm:$0xf]
  %v58 = vld [vmem:[%s2 + $0x170] sm:$0xf]
  %v59 = vld [vmem:[%s2 + $0x4] sm:$0xf]
  %v60 = vld [vmem:[%s2 + $0x14] sm:$0xf]
  %v61 = vld [vmem:[%s2 + $0x24] sm:$0xf]
  %v62 = vld [vmem:[%s2 + $0x34] sm:$0xf]
  %v63 = vld [vmem:[%s2 + $0x44] sm:$0xf]
  %v64 = vld [vmem:[%s2 + $0x54] sm:$0xf]
  %v65 = vld [vmem:[%s2 + $0x64] sm:$0xf]
  %v66 = vld [vmem:[%s2 + $0x74] sm:$0xf]
  %v67 = vld [vmem:[%s2 + $0x84] sm:$0xf]
  %v68 = vld [vmem:[%s2 + $0x94] sm:$0xf]
  %v69 = vld [vmem:[%s2 + $0xa4] sm:$0xf]
  %v70 = vld [vmem:[%s2 + $0xb4] sm:$0xf]
  %v71 = vld [vmem:[%s2 + $0xc4] sm:$0xf]
  %v72 = vld [vmem:[%s2 + $0xd4] sm:$0xf]
  %v73 = vld [vmem:[%s2 + $0xe4] sm:$0xf]
  %v74 = vld [vmem:[%s2 + $0xf4] sm:$0xf]
  %v75 = vld [vmem:[%s2 + $0x104] sm:$0xf]
  %v76 = vld [vmem:[%s2 + $0x114] sm:$0xf]
  %v77 = vld [vmem:[%s2 + $0x124] sm:$0xf]
  %v78 = vld [vmem:[%s2 + $0x134] sm:$0xf]
  %v79 = vld [vmem:[%s2 + $0x144] sm:$0xf]
  %v80 = vld [vmem:[%s2 + $0x154] sm:$0xf]
  %v81 = vld [vmem:[%s2 + $0x164] sm:$0xf]
  %v82 = vld [vmem:[%s2 + $0x174] sm:$0xf]
  %v83 = vld [vmem:[%s2 + $0x8] sm:$0xff]
  %v84 = vld [vmem:[%s2 + $0x18] sm:$0xff]
  %v85 = vld [vmem:[%s2 + $0x28] sm:$0xff]
  %v86 = vld [vmem:[%s2 + $0x38] sm:$0xff]
  %v87 = vld [vmem:[%s2 + $0x48] sm:$0xff]
  %v88 = vld [vmem:[%s2 + $0x58] sm:$0xff]
  %v89 = vld [vmem:[%s2 + $0x68] sm:$0xff]
  %v90 = vld [vmem:[%s2 + $0x78] sm:$0xff]
  %v91 = vld [vmem:[%s2 + $0x88] sm:$0xff]
  %v92 = vld [vmem:[%s2 + $0x98] sm:$0xff]
  %v93 = vld [vmem:[%s2 + $0xa8] sm:$0xff]
  %v94 = vld [vmem:[%s2 + $0xb8] sm:$0xff]
  %v95 = vld [vmem:[%s2 + $0xc8] sm:$0xff]
  %v96 = vld [vmem:[%s2 + $0xd8] sm:$0xff]
  %v97 = vld [vmem:[%s2 + $0xe8] sm:$0xff]
  %v98 = vld [vmem:[%s2 + $0xf8] sm:$0xff]
  %v99 = vld [vmem:[%s2 + $0x108] sm:$0xff]
  %v100 = vld [vmem:[%s2 + $0x118] sm:$0xff]
  %v101 = vld [vmem:[%s2 + $0x128] sm:$0xff]
  %v102 = vld [vmem:[%s2 + $0x138] sm:$0xff]
  %v103 = vld [vmem:[%s2 + $0x148] sm:$0xff]
  %v104 = vld [vmem:[%s2 + $0x158] sm:$0xff]
  %v105 = vld [vmem:[%s2 + $0x168] sm:$0xff]
  %v106 = vld [vmem:[%s2 + $0x178] sm:$0xff]
  %v107 = vld [vmem:[%s3] sm:$0xf]
  %v108 = vld [vmem:[%s3 + $0x10] sm:$0xf]
  %v109 = vld [vmem:[%s3 + $0x20] sm:$0xf]
  %v110 = vld [vmem:[%s3 + $0x30] sm:$0xf]
  %v111 = vld [vmem:[%s3 + $0x40] sm:$0xf]
  %v112 = vld [vmem:[%s3 + $0x50] sm:$0xf]
  %v113 = vld [vmem:[%s3 + $0x60] sm:$0xf]
  %v114 = vld [vmem:[%s3 + $0x70] sm:$0xf]
  %v115 = vld [vmem:[%s3 + $0x80] sm:$0xf]
  %v116 = vld [vmem:[%s3 + $0x90] sm:$0xf]
  %v117 = vld [vmem:[%s3 + $0xa0] sm:$0xf]
  %v118 = vld [vmem:[%s3 + $0xb0] sm:$0xf]
  %v119 = vld [vmem:[%s3 + $0xc0] sm:$0xf]
  %v120 = vld [vmem:[%s3 + $0xd0] sm:$0xf]
  %v121 = vld [vmem:[%s3 + $0xe0] sm:$0xf]
  %v122 = vld [vmem:[%s3 + $0xf0] sm:$0xf]
  %v123 = vld [vmem:[%s3 + $0x100] sm:$0xf]
  %v124 = vld [vmem:[%s3 + $0x110] sm:$0xf]
  %v125 = vld [vmem:[%s3 + $0x120] sm:$0xf]
  %v126 = vld [vmem:[%s3 + $0x130] sm:$0xf]
  %v127 = vld [vmem:[%s3 + $0x140] sm:$0xf]
  %v128 = vld [vmem:[%s3 + $0x150] sm:$0xf]
  %v129 = vld [vmem:[%s3 + $0x160] sm:$0xf]
  %v130 = vld [vmem:[%s3 + $0x170] sm:$0xf]
  %v131 = vld [vmem:[%s3 + $0x180] sm:$0xf]
  %v132 = vld [vmem:[%s3 + $0x190] sm:$0xf]
  %v133 = vld [vmem:[%s3 + $0x1a0] sm:$0xf]
  %v134 = vld [vmem:[%s3 + $0x1b0] sm:$0xf]
  %v135 = vld [vmem:[%s3 + $0x1c0] sm:$0xf]
  %v136 = vld [vmem:[%s3 + $0x1d0] sm:$0xf]
  %v137 = vld [vmem:[%s3 + $0x1e0] sm:$0xf]
  %v138 = vld [vmem:[%s3 + $0x1f0] sm:$0xf]
  %v139 = vld [vmem:[%s3 + $0x200] sm:$0xf]
  %v140 = vld [vmem:[%s3 + $0x210] sm:$0xf]
  %v141 = vld [vmem:[%s3 + $0x220] sm:$0xf]
  %v142 = vld [vmem:[%s3 + $0x230] sm:$0xf]
  %v143 = vld [vmem:[%s3 + $0x240] sm:$0xf]
  %v144 = vld [vmem:[%s3 + $0x250] sm:$0xf]
  %v145 = vld [vmem:[%s3 + $0x260] sm:$0xf]
  %v146 = vld [vmem:[%s3 + $0x270] sm:$0xf]
  %v147 = vld [vmem:[%s3 + $0x280] sm:$0xf]
  %v148 = vld [vmem:[%s3 + $0x290] sm:$0xf]
  %v149 = vld [vmem:[%s3 + $0x2a0] sm:$0xf]
  %v150 = vld [vmem:[%s3 + $0x2b0] sm:$0xf]
  %v151 = vld [vmem:[%s3 + $0x2c0] sm:$0xf]
  %v152 = vld [vmem:[%s3 + $0x2d0] sm:$0xf]
  %v153 = vld [vmem:[%s3 + $0x2e0] sm:$0xf]
  %v154 = vld [vmem:[%s3 + $0x2f0] sm:$0xf]
  %v155 = vld [vmem:[%s3 + $0x4] sm:$0xf]
  %v156 = vld [vmem:[%s3 + $0x14] sm:$0xf]
  %v157 = vld [vmem:[%s3 + $0x24] sm:$0xf]
  %v158 = vld [vmem:[%s3 + $0x34] sm:$0xf]
  %v159 = vld [vmem:[%s3 + $0x44] sm:$0xf]
  %v160 = vld [vmem:[%s3 + $0x54] sm:$0xf]
  %v161 = vld [vmem:[%s3 + $0x64] sm:$0xf]
  %v162 = vld [vmem:[%s3 + $0x74] sm:$0xf]
  %v163 = vld [vmem:[%s3 + $0x84] sm:$0xf]
  %v164 = vld [vmem:[%s3 + $0x94] sm:$0xf]
  %v165 = vld [vmem:[%s3 + $0xa4] sm:$0xf]
  %v166 = vld [vmem:[%s3 + $0xb4] sm:$0xf]
  %v167 = vld [vmem:[%s3 + $0xc4] sm:$0xf]
  %v168 = vld [vmem:[%s3 + $0xd4] sm:$0xf]
  %v169 = vld [vmem:[%s3 + $0xe4] sm:$0xf]
  %v170 = vld [vmem:[%s3 + $0xf4] sm:$0xf]
  %v171 = vld [vmem:[%s3 + $0x104] sm:$0xf]
  %v172 = vld [vmem:[%s3 + $0x114] sm:$0xf]
  %v173 = vld [vmem:[%s3 + $0x124] sm:$0xf]
  %v174 = vld [vmem:[%s3 + $0x134] sm:$0xf]
  %v175 = vld [vmem:[%s3 + $0x144] sm:$0xf]
  %v176 = vld [vmem:[%s3 + $0x154] sm:$0xf]
  %v177 = vld [vmem:[%s3 + $0x164] sm:$0xf]
  %v178 = vld [vmem:[%s3 + $0x174] sm:$0xf]
  %v179 = vld [vmem:[%s3 + $0x184] sm:$0xf]
  %v180 = vld [vmem:[%s3 + $0x194] sm:$0xf]
  %v181 = vld [vmem:[%s3 + $0x1a4] sm:$0xf]
  %v182 = vld [vmem:[%s3 + $0x1b4] sm:$0xf]
  %v183 = vld [vmem:[%s3 + $0x1c4] sm:$0xf]
  %v184 = vld [vmem:[%s3 + $0x1d4] sm:$0xf]
  %v185 = vld [vmem:[%s3 + $0x1e4] sm:$0xf]
  %v186 = vld [vmem:[%s3 + $0x1f4] sm:$0xf]
  %v187 = vld [vmem:[%s3 + $0x204] sm:$0xf]
  %v188 = vld [vmem:[%s3 + $0x214] sm:$0xf]
  %v189 = vld [vmem:[%s3 + $0x224] sm:$0xf]
  %v190 = vld [vmem:[%s3 + $0x234] sm:$0xf]
  %v191 = vld [vmem:[%s3 + $0x244] sm:$0xf]
  %v192 = vld [vmem:[%s3 + $0x254] sm:$0xf]
  %v193 = vld [vmem:[%s3 + $0x264] sm:$0xf]
  %v194 = vld [vmem:[%s3 + $0x274] sm:$0xf]
  %v195 = vld [vmem:[%s3 + $0x284] sm:$0xf]
  %v196 = vld [vmem:[%s3 + $0x294] sm:$0xf]
  %v197 = vld [vmem:[%s3 + $0x2a4] sm:$0xf]
  %v198 = vld [vmem:[%s3 + $0x2b4] sm:$0xf]
  %v199 = vld [vmem:[%s3 + $0x2c4] sm:$0xf]
  %v200 = vld [vmem:[%s3 + $0x2d4] sm:$0xf]
  %v201 = vld [vmem:[%s3 + $0x2e4] sm:$0xf]
  %v202 = vld [vmem:[%s3 + $0x2f4] sm:$0xf]
  %v203 = vld [vmem:[%s3 + $0x8] sm:$0xf]
  %v204 = vld [vmem:[%s3 + $0x18] sm:$0xf]
  %v205 = vld [vmem:[%s3 + $0x28] sm:$0xf]
  %v206 = vld [vmem:[%s3 + $0x38] sm:$0xf]
  %v207 = vld [vmem:[%s3 + $0x48] sm:$0xf]
  %v208 = vld [vmem:[%s3 + $0x58] sm:$0xf]
  %v209 = vld [vmem:[%s3 + $0x68] sm:$0xf]
  %v210 = vld [vmem:[%s3 + $0x78] sm:$0xf]
  %v211 = vld [vmem:[%s3 + $0x88] sm:$0xf]
  %v212 = vld [vmem:[%s3 + $0x98] sm:$0xf]
  %v213 = vld [vmem:[%s3 + $0xa8] sm:$0xf]
  %v214 = vld [vmem:[%s3 + $0xb8] sm:$0xf]
  %v215 = vld [vmem:[%s3 + $0xc8] sm:$0xf]
  %v216 = vld [vmem:[%s3 + $0xd8] sm:$0xf]
  %v217 = vld [vmem:[%s3 + $0xe8] sm:$0xf]
  %v218 = vld [vmem:[%s3 + $0xf8] sm:$0xf]
  %v219 = vld [vmem:[%s3 + $0x108] sm:$0xf]
  %v220 = vld [vmem:[%s3 + $0x118] sm:$0xf]
  %v221 = vld [vmem:[%s3 + $0x128] sm:$0xf]
  %v222 = vld [vmem:[%s3 + $0x138] sm:$0xf]
  %v223 = vld [vmem:[%s3 + $0x148] sm:$0xf]
  %v224 = vld [vmem:[%s3 + $0x158] sm:$0xf]
  %v225 = vld [vmem:[%s3 + $0x168] sm:$0xf]
  %v226 = vld [vmem:[%s3 + $0x178] sm:$0xf]
  %v227 = vld [vmem:[%s3 + $0x188] sm:$0xf]
  %v228 = vld [vmem:[%s3 + $0x198] sm:$0xf]
  %v229 = vld [vmem:[%s3 + $0x1a8] sm:$0xf]
  %v230 = vld [vmem:[%s3 + $0x1b8] sm:$0xf]
  %v231 = vld [vmem:[%s3 + $0x1c8] sm:$0xf]
  %v232 = vld [vmem:[%s3 + $0x1d8] sm:$0xf]
  %v233 = vld [vmem:[%s3 + $0x1e8] sm:$0xf]
  %v234 = vld [vmem:[%s3 + $0x1f8] sm:$0xf]
  %v235 = vld [vmem:[%s3 + $0x208] sm:$0xf]
  %v236 = vld [vmem:[%s3 + $0x218] sm:$0xf]
  %v237 = vld [vmem:[%s3 + $0x228] sm:$0xf]
  %v238 = vld [vmem:[%s3 + $0x238] sm:$0xf]
  %v239 = vld [vmem:[%s3 + $0x248] sm:$0xf]
  %v240 = vld [vmem:[%s3 + $0x258] sm:$0xf]
  %v241 = vld [vmem:[%s3 + $0x268] sm:$0xf]
  %v242 = vld [vmem:[%s3 + $0x278] sm:$0xf]
  %v243 = vld [vmem:[%s3 + $0x288] sm:$0xf]
  %v244 = vld [vmem:[%s3 + $0x298] sm:$0xf]
  %v245 = vld [vmem:[%s3 + $0x2a8] sm:$0xf]
  %v246 = vld [vmem:[%s3 + $0x2b8] sm:$0xf]
  %v247 = vld [vmem:[%s3 + $0x2c8] sm:$0xf]
  %v248 = vld [vmem:[%s3 + $0x2d8] sm:$0xf]
  %v249 = vld [vmem:[%s3 + $0x2e8] sm:$0xf]
  %v250 = vld [vmem:[%s3 + $0x2f8] sm:$0xf]
  %v251 = vld [vmem:[%s3 + $0xc] sm:$0xf]
  %v252 = vld [vmem:[%s3 + $0x1c] sm:$0xf]
  %v253 = vld [vmem:[%s3 + $0x2c] sm:$0xf]
  %v254 = vld [vmem:[%s3 + $0x3c] sm:$0xf]
  %v255 = vld [vmem:[%s3 + $0x4c] sm:$0xf]
  %v256 = vld [vmem:[%s3 + $0x5c] sm:$0xf]
  %v257 = vld [vmem:[%s3 + $0x6c] sm:$0xf]
  %v258 = vld [vmem:[%s3 + $0x7c] sm:$0xf]
  %v259 = vld [vmem:[%s3 + $0x8c] sm:$0xf]
  %v260 = vld [vmem:[%s3 + $0x9c] sm:$0xf]
  %v261 = vld [vmem:[%s3 + $0xac] sm:$0xf]
  %v262 = vld [vmem:[%s3 + $0xbc] sm:$0xf]
  %v263 = vld [vmem:[%s3 + $0xcc] sm:$0xf]
  %v264 = vld [vmem:[%s3 + $0xdc] sm:$0xf]
  %v265 = vld [vmem:[%s3 + $0xec] sm:$0xf]
  %v266 = vld [vmem:[%s3 + $0xfc] sm:$0xf]
  %v267 = vld [vmem:[%s3 + $0x10c] sm:$0xf]
  %v268 = vld [vmem:[%s3 + $0x11c] sm:$0xf]
  %v269 = vld [vmem:[%s3 + $0x12c] sm:$0xf]
  %v270 = vld [vmem:[%s3 + $0x13c] sm:$0xf]
  %v271 = vld [vmem:[%s3 + $0x14c] sm:$0xf]
  %v272 = vld [vmem:[%s3 + $0x15c] sm:$0xf]
  %v273 = vld [vmem:[%s3 + $0x16c] sm:$0xf]
  %v274 = vld [vmem:[%s3 + $0x17c] sm:$0xf]
  %v275 = vld [vmem:[%s3 + $0x18c] sm:$0xf]
  %v276 = vld [vmem:[%s3 + $0x19c] sm:$0xf]
  %v277 = vld [vmem:[%s3 + $0x1ac] sm:$0xf]
  %v278 = vld [vmem:[%s3 + $0x1bc] sm:$0xf]
  %v279 = vld [vmem:[%s3 + $0x1cc] sm:$0xf]
  %v280 = vld [vmem:[%s3 + $0x1dc] sm:$0xf]
  %v281 = vld [vmem:[%s3 + $0x1ec] sm:$0xf]
  %v282 = vld [vmem:[%s3 + $0x1fc] sm:$0xf]
  %v283 = vld [vmem:[%s3 + $0x20c] sm:$0xf]
  %v284 = vld [vmem:[%s3 + $0x21c] sm:$0xf]
  %v285 = vld [vmem:[%s3 + $0x22c] sm:$0xf]
  %v286 = vld [vmem:[%s3 + $0x23c] sm:$0xf]
  %v287 = vld [vmem:[%s3 + $0x24c] sm:$0xf]
  %v288 = vld [vmem:[%s3 + $0x25c] sm:$0xf]
  %v289 = vld [vmem:[%s3 + $0x26c] sm:$0xf]
  %v290 = vld [vmem:[%s3 + $0x27c] sm:$0xf]
  %v291 = vld [vmem:[%s3 + $0x28c] sm:$0xf]
  %v292 = vld [vmem:[%s3 + $0x29c] sm:$0xf]
  %v293 = vld [vmem:[%s3 + $0x2ac] sm:$0xf]
  %v294 = vld [vmem:[%s3 + $0x2bc] sm:$0xf]
  %v295 = vld [vmem:[%s3 + $0x2cc] sm:$0xf]
  %v296 = vld [vmem:[%s3 + $0x2dc] sm:$0xf]
  %v297 = vld [vmem:[%s3 + $0x2ec] sm:$0xf]
  %v298 = vld [vmem:[%s3 + $0x2fc] sm:$0xf]
  %v299 = vld [vmem:[%s4] ss:$0 sm:$0xff]
  %v300 = vld [vmem:[%s4 + $0x1] ss:$0 sm:$0xff]
  %s301 = scalar_lea.vmem %s4, 2
  %v302 = vld [vmem:[%s301] ss:$8 sm:$0x3]
  %v303 = vld [vmem:[%s4 + $0x3] ss:$0 sm:$0xff]
  %v304 = vld [vmem:[%s4 + $0x4] ss:$0 sm:$0xff]
  %v305 = vld [vmem:[%s4] sm:$0xe0]
  %v306 = vld [vmem:[%s4 + $0x10] sm:$0x1]
  %v307 = vld [vmem:[%s4 + $0x11] ss:$0 sm:$0xff]
  %v308 = vld [vmem:[%s4 + $0x10] sm:$0x3c]
  %v309 = vld [vmem:[%s4 + $0x16] ss:$0 sm:$0xff]
  %v310 = vpack.c.bf16 %v24, %v23
  %v311 = vpack.c.bf16 %v26, %v25
  %v313 = vshrl.u32 %v310, 16
  %v316 = vshrl.u32 %v311, 16
  %v320 = vrot.slane %v313, 7
  %v321 = vshll.u32 %v310, 16
  %v323 = vor.u32 %v320, %v321
  %v324 = vrot.slane %v316, 7
  %v325 = vshll.u32 %v311, 16
  %v327 = vor.u32 %v324, %v325
  %vm330 = vcmask 1040384
  %vm331 = vsmask.f32 256
  %vm332 = vmand %vm330, %vm331
  %v333 = vsel %vm332, %v313, %v323
  %v334 = vsel %vm332, %v316, %v327
  %v335 = vrot.slane %v321, 1
  %v336 = vor.u32 %v313, %v335
  %v337 = vrot.slane %v325, 1
  %v338 = vor.u32 %v316, %v337
  %vm343 = vcmask 1047552
  %vm344 = vsmask.f32 7424
  %vm345 = vmand %vm343, %vm344
  %v346 = vsel %vm345, %v336, %v321
  %v347 = vsel %vm345, %v338, %v325
  %350 = vrot.lane.b32.xlu0 %v310, 64
  %v351 = vpop.permute.xlu0 %350
  %352 = vrot.lane.b32.xlu0 %v311, 64
  %v353 = vpop.permute.xlu0 %352
  %vm354 = vcmask 523264
  %v357 = vsel %vm354, %v333, %v351
  %v361 = vsel %vm354, %v334, %v353
  %v387 = vunpack.c.l.b16 %v35
  %v388 = vunpack.c.l.b16 %v36
  %v389 = vunpack.c.l.b16 %v37
  %v390 = vunpack.c.l.b16 %v38
  %v391 = vunpack.c.l.b16 %v39
  %v392 = vunpack.c.l.b16 %v40
  %v393 = vunpack.c.l.b16 %v41
  %v394 = vunpack.c.l.b16 %v42
  %v395 = vunpack.c.l.b16 %v43
  %v396 = vunpack.c.l.b16 %v44
  %v397 = vunpack.c.l.b16 %v45
  %v398 = vunpack.c.l.b16 %v46
  %v399 = vunpack.c.l.b16 %v47
  %v400 = vunpack.c.l.b16 %v48
  %v401 = vunpack.c.l.b16 %v49
  %v402 = vunpack.c.l.b16 %v50
  %v403 = vunpack.c.l.b16 %v51
  %v404 = vunpack.c.l.b16 %v52
  %v405 = vunpack.c.l.b16 %v53
  %v406 = vunpack.c.l.b16 %v54
  %v407 = vunpack.c.l.b16 %v55
  %v408 = vunpack.c.l.b16 %v56
  %v409 = vunpack.c.l.b16 %v57
  %v410 = vunpack.c.l.b16 %v58
  %v411 = vpack.c.b16 %v388, %v387
  %v412 = vpack.c.b16 %v390, %v389
  %v413 = vpack.c.b16 %v392, %v391
  %v414 = vpack.c.b16 %v394, %v393
  %v415 = vpack.c.b16 %v396, %v395
  %v416 = vpack.c.b16 %v398, %v397
  %v417 = vpack.c.b16 %v400, %v399
  %v418 = vpack.c.b16 %v402, %v401
  %v419 = vpack.c.b16 %v404, %v403
  %v420 = vpack.c.b16 %v406, %v405
  %v421 = vpack.c.b16 %v408, %v407
  %v422 = vpack.c.b16 %v410, %v409
  %v436 = vsel %vm354, %v346, 0
  %v439 = vsel %vm354, %v347, 0
  %441 = vmatprep.subr.bf16.mxu0 0
  %442 = vmatpush1.bf16.msra.mxu0 %v418
  %443 = vmatprep.subr.bf16.mxu0 0
  %444 = vmatpush1.bf16.msra.mxu0 %v417
  %445 = vmatprep.subr.bf16.mxu0 0
  %446 = vmatpush1.bf16.msra.mxu0 %v416
  %447 = vmatprep.subr.bf16.mxu0 0
  %448 = vmatpush1.bf16.msra.mxu0 %v415
  %449 = vmatprep.subr.bf16.mxu0 0
  %450 = vmatpush1.bf16.msra.mxu0 %v414
  %451 = vmatprep.subr.bf16.mxu0 0
  %452 = vmatpush1.bf16.msra.mxu0 %v413
  %453 = vmatprep.subr.bf16.mxu0 0
  %454 = vmatpush1.bf16.msra.mxu0 %v412
  %455 = vmatprep.subr.bf16.mxu0 0
  %456 = vmatpush1.bf16.msra.mxu0 %v411
  %457 = vmatprep.subr.bf16.mxu0 0
  %458 = vmatpush2.bf16.msra.mxu0 0
  %459 = vmatprep.subr.bf16.mxu0 0
  %460 = vmatpush2.bf16.msra.mxu0 0
  %461 = vmatprep.subr.bf16.mxu0 0
  %462 = vmatpush2.bf16.msra.mxu0 0
  %463 = vmatprep.subr.bf16.mxu0 0
  %464 = vmatpush2.bf16.msra.mxu0 0
  %465 = vmatprep.subr.bf16.mxu0 0
  %466 = vmatpush2.bf16.msra.mxu0 %v422
  %467 = vmatprep.subr.bf16.mxu0 0
  %468 = vmatpush2.bf16.msra.mxu0 %v421
  %469 = vmatprep.subr.bf16.mxu0 0
  %470 = vmatpush2.bf16.msra.mxu0 %v420
  %471 = vmatprep.subr.bf16.mxu0 0
  %472 = vmatpush2.bf16.msra.mxu0 %v419
  %473 = vmatprep.mubr.bf16.mxu0 %v436
  %474 = vmatmul.mubr.bf16.gmra.mxu0 %v357
  %v475 = vpop.f32.mrf.mxu0
  %v476 = vadd.f32 0.0, %v475
  %v477 = vpop.f32.mrf.mxu0
  %v478 = vpop.f32.mrf.mxu0
  %v479 = vadd.f32 0.0, %v478
  %v480 = vpop.f32.mrf.mxu0
  %481 = vmatprep.mubr.bf16.mxu0 %v439
  %482 = vmatmul.mubr.bf16.gmra.mxu0 %v361
  %v483 = vpop.f32.mrf.mxu0
  %v484 = vadd.f32 0.0, %v483
  %v485 = vpop.f32.mrf.mxu0
  %v486 = vpop.f32.mrf.mxu0
  %v487 = vadd.f32 0.0, %v486
  %v488 = vpop.f32.mrf.mxu0
  %489 = vdwg.mxu0
  %v490 = vadd.f32 %v476, %v299
  %v491 = vadd.f32 %v479, %v299
  %v492 = vadd.f32 %v484, %v299
  %v493 = vadd.f32 %v487, %v299
  %v494 = vmax.f32 %v490, 0.0
  %v495 = vmax.f32 %v491, 0.0
  %v496 = vmax.f32 %v492, 0.0
  %v497 = vmax.f32 %v493, 0.0
  %v498 = vpack.c.bf16 %v495, %v494
  %v499 = vpack.c.bf16 %v497, %v496
  %v501 = vshrl.u32 %v498, 16
  %v504 = vshrl.u32 %v499, 16
  %v508 = vrot.slane %v501, 7
  %v509 = vshll.u32 %v498, 16
  %v511 = vor.u32 %v508, %v509
  %v512 = vrot.slane %v504, 7
  %v513 = vshll.u32 %v499, 16
  %v515 = vor.u32 %v512, %v513
  %v518 = vsel %vm332, %v501, %v511
  %v519 = vsel %vm332, %v504, %v515
  %v520 = vrot.slane %v509, 1
  %v521 = vor.u32 %v501, %v520
  %v522 = vrot.slane %v513, 1
  %v523 = vor.u32 %v504, %v522
  %v528 = vsel %vm345, %v521, %v509
  %v529 = vsel %vm345, %v523, %v513
  %532 = vrot.lane.b32.xlu0 %v498, 64
  %v533 = vpop.permute.xlu0 %532
  %534 = vrot.lane.b32.xlu0 %v499, 64
  %v535 = vpop.permute.xlu0 %534
  %v538 = vsel %vm354, %v518, %v533
  %v542 = vsel %vm354, %v519, %v535
  %v568 = vunpack.c.l.b16 %v59
  %v569 = vunpack.c.l.b16 %v60
  %v570 = vunpack.c.l.b16 %v61
  %v571 = vunpack.c.l.b16 %v62
  %v572 = vunpack.c.l.b16 %v63
  %v573 = vunpack.c.l.b16 %v64
  %v574 = vunpack.c.l.b16 %v65
  %v575 = vunpack.c.l.b16 %v66
  %v576 = vunpack.c.l.b16 %v67
  %v577 = vunpack.c.l.b16 %v68
  %v578 = vunpack.c.l.b16 %v69
  %v579 = vunpack.c.l.b16 %v70
  %v580 = vunpack.c.l.b16 %v71
  %v581 = vunpack.c.l.b16 %v72
  %v582 = vunpack.c.l.b16 %v73
  %v583 = vunpack.c.l.b16 %v74
  %v584 = vunpack.c.l.b16 %v75
  %v585 = vunpack.c.l.b16 %v76
  %v586 = vunpack.c.l.b16 %v77
  %v587 = vunpack.c.l.b16 %v78
  %v588 = vunpack.c.l.b16 %v79
  %v589 = vunpack.c.l.b16 %v80
  %v590 = vunpack.c.l.b16 %v81
  %v591 = vunpack.c.l.b16 %v82
  %v592 = vpack.c.b16 %v569, %v568
  %v593 = vpack.c.b16 %v571, %v570
  %v594 = vpack.c.b16 %v573, %v572
  %v595 = vpack.c.b16 %v575, %v574
  %v596 = vpack.c.b16 %v577, %v576
  %v597 = vpack.c.b16 %v579, %v578
  %v598 = vpack.c.b16 %v581, %v580
  %v599 = vpack.c.b16 %v583, %v582
  %v600 = vpack.c.b16 %v585, %v584
  %v601 = vpack.c.b16 %v587, %v586
  %v602 = vpack.c.b16 %v589, %v588
  %v603 = vpack.c.b16 %v591, %v590
  %v617 = vsel %vm354, %v528, 0
  %v620 = vsel %vm354, %v529, 0
  %622 = vmatprep.subr.bf16.mxu0 0
  %623 = vmatpush1.bf16.msra.mxu0 %v599
  %624 = vmatprep.subr.bf16.mxu0 0
  %625 = vmatpush1.bf16.msra.mxu0 %v598
  %626 = vmatprep.subr.bf16.mxu0 0
  %627 = vmatpush1.bf16.msra.mxu0 %v597
  %628 = vmatprep.subr.bf16.mxu0 0
  %629 = vmatpush1.bf16.msra.mxu0 %v596
  %630 = vmatprep.subr.bf16.mxu0 0
  %631 = vmatpush1.bf16.msra.mxu0 %v595
  %632 = vmatprep.subr.bf16.mxu0 0
  %633 = vmatpush1.bf16.msra.mxu0 %v594
  %634 = vmatprep.subr.bf16.mxu0 0
  %635 = vmatpush1.bf16.msra.mxu0 %v593
  %636 = vmatprep.subr.bf16.mxu0 0
  %637 = vmatpush1.bf16.msra.mxu0 %v592
  %638 = vmatprep.subr.bf16.mxu0 0
  %639 = vmatpush2.bf16.msra.mxu0 0
  %640 = vmatprep.subr.bf16.mxu0 0
  %641 = vmatpush2.bf16.msra.mxu0 0
  %642 = vmatprep.subr.bf16.mxu0 0
  %643 = vmatpush2.bf16.msra.mxu0 0
  %644 = vmatprep.subr.bf16.mxu0 0
  %645 = vmatpush2.bf16.msra.mxu0 0
  %646 = vmatprep.subr.bf16.mxu0 0
  %647 = vmatpush2.bf16.msra.mxu0 %v603
  %648 = vmatprep.subr.bf16.mxu0 0
  %649 = vmatpush2.bf16.msra.mxu0 %v602
  %650 = vmatprep.subr.bf16.mxu0 0
  %651 = vmatpush2.bf16.msra.mxu0 %v601
  %652 = vmatprep.subr.bf16.mxu0 0
  %653 = vmatpush2.bf16.msra.mxu0 %v600
  %654 = vmatprep.mubr.bf16.mxu0 %v617
  %655 = vmatmul.mubr.bf16.gmra.mxu0 %v538
  %v656 = vpop.f32.mrf.mxu0
  %v657 = vadd.f32 0.0, %v656
  %v658 = vpop.f32.mrf.mxu0
  %v659 = vpop.f32.mrf.mxu0
  %v660 = vadd.f32 0.0, %v659
  %v661 = vpop.f32.mrf.mxu0
  %662 = vmatprep.mubr.bf16.mxu0 %v620
  %663 = vmatmul.mubr.bf16.gmra.mxu0 %v542
  %v664 = vpop.f32.mrf.mxu0
  %v665 = vadd.f32 0.0, %v664
  %v666 = vpop.f32.mrf.mxu0
  %v667 = vpop.f32.mrf.mxu0
  %v668 = vadd.f32 0.0, %v667
  %v669 = vpop.f32.mrf.mxu0
  %670 = vdwg.mxu0
  %v671 = vadd.f32 %v657, %v300
  %v672 = vadd.f32 %v660, %v300
  %v673 = vadd.f32 %v665, %v300
  %v674 = vadd.f32 %v668, %v300
  %v675 = vadd.f32 %v671, %v23
  %v676 = vadd.f32 %v672, %v24
  %v677 = vadd.f32 %v673, %v25
  %v678 = vadd.f32 %v674, %v26
  %v679 = vmax.f32 %v675, 0.0
  %v680 = vmax.f32 %v676, 0.0
  %v681 = vmax.f32 %v677, 0.0
  %v682 = vmax.f32 %v678, 0.0
  %v683 = vpack.c.bf16 %v680, %v679
  %v684 = vpack.c.bf16 %v682, %v681
  %v686 = vshrl.u32 %v683, 16
  %v689 = vshrl.u32 %v684, 16
  %v693 = vrot.slane %v686, 7
  %v694 = vshll.u32 %v683, 16
  %v696 = vor.u32 %v693, %v694
  %v697 = vrot.slane %v689, 7
  %v698 = vshll.u32 %v684, 16
  %v700 = vor.u32 %v697, %v698
  %v703 = vsel %vm332, %v686, %v696
  %v704 = vsel %vm332, %v689, %v700
  %v705 = vrot.slane %v694, 1
  %v706 = vor.u32 %v686, %v705
  %v707 = vrot.slane %v698, 1
  %v708 = vor.u32 %v689, %v707
  %v713 = vsel %vm345, %v706, %v694
  %v714 = vsel %vm345, %v708, %v698
  %717 = vrot.lane.b32.xlu0 %v683, 64
  %v718 = vpop.permute.xlu0 %717
  %719 = vrot.lane.b32.xlu0 %v684, 64
  %v720 = vpop.permute.xlu0 %719
  %v723 = vsel %vm354, %v703, %v718
  %v727 = vsel %vm354, %v704, %v720
  %v753 = vunpack.c.l.b16 %v83
  %v754 = vunpack.c.h.b16 %v83
  %v755 = vunpack.c.l.b16 %v84
  %v756 = vunpack.c.h.b16 %v84
  %v757 = vunpack.c.l.b16 %v85
  %v758 = vunpack.c.h.b16 %v85
  %v759 = vunpack.c.l.b16 %v86
  %v760 = vunpack.c.h.b16 %v86
  %v761 = vunpack.c.l.b16 %v87
  %v762 = vunpack.c.h.b16 %v87
  %v763 = vunpack.c.l.b16 %v88
  %v764 = vunpack.c.h.b16 %v88
  %v765 = vunpack.c.l.b16 %v89
  %v766 = vunpack.c.h.b16 %v89
  %v767 = vunpack.c.l.b16 %v90
  %v768 = vunpack.c.h.b16 %v90
  %v769 = vunpack.c.l.b16 %v91
  %v770 = vunpack.c.h.b16 %v91
  %v771 = vunpack.c.l.b16 %v92
  %v772 = vunpack.c.h.b16 %v92
  %v773 = vunpack.c.l.b16 %v93
  %v774 = vunpack.c.h.b16 %v93
  %v775 = vunpack.c.l.b16 %v94
  %v776 = vunpack.c.h.b16 %v94
  %v777 = vunpack.c.l.b16 %v95
  %v778 = vunpack.c.h.b16 %v95
  %v779 = vunpack.c.l.b16 %v96
  %v780 = vunpack.c.h.b16 %v96
  %v781 = vunpack.c.l.b16 %v97
  %v782 = vunpack.c.h.b16 %v97
  %v783 = vunpack.c.l.b16 %v98
  %v784 = vunpack.c.h.b16 %v98
  %v785 = vunpack.c.l.b16 %v99
  %v786 = vunpack.c.h.b16 %v99
  %v787 = vunpack.c.l.b16 %v100
  %v788 = vunpack.c.h.b16 %v100
  %v789 = vunpack.c.l.b16 %v101
  %v790 = vunpack.c.h.b16 %v101
  %v791 = vunpack.c.l.b16 %v102
  %v792 = vunpack.c.h.b16 %v102
  %v793 = vunpack.c.l.b16 %v103
  %v794 = vunpack.c.h.b16 %v103
  %v795 = vunpack.c.l.b16 %v104
  %v796 = vunpack.c.h.b16 %v104
  %v797 = vunpack.c.l.b16 %v105
  %v798 = vunpack.c.h.b16 %v105
  %v799 = vunpack.c.l.b16 %v106
  %v800 = vunpack.c.h.b16 %v106
  %v801 = vpack.c.b16 %v755, %v753
  %v802 = vpack.c.b16 %v756, %v754
  %v803 = vpack.c.b16 %v759, %v757
  %v804 = vpack.c.b16 %v760, %v758
  %v805 = vpack.c.b16 %v763, %v761
  %v806 = vpack.c.b16 %v764, %v762
  %v807 = vpack.c.b16 %v767, %v765
  %v808 = vpack.c.b16 %v768, %v766
  %v809 = vpack.c.b16 %v771, %v769
  %v810 = vpack.c.b16 %v772, %v770
  %v811 = vpack.c.b16 %v775, %v773
  %v812 = vpack.c.b16 %v776, %v774
  %v813 = vpack.c.b16 %v779, %v777
  %v814 = vpack.c.b16 %v780, %v778
  %v815 = vpack.c.b16 %v783, %v781
  %v816 = vpack.c.b16 %v784, %v782
  %v817 = vpack.c.b16 %v787, %v785
  %v818 = vpack.c.b16 %v788, %v786
  %v819 = vpack.c.b16 %v791, %v789
  %v820 = vpack.c.b16 %v792, %v790
  %v821 = vpack.c.b16 %v795, %v793
  %v822 = vpack.c.b16 %v796, %v794
  %v823 = vpack.c.b16 %v799, %v797
  %v824 = vpack.c.b16 %v800, %v798
  %v850 = vsel %vm354, %v713, 0
  %v853 = vsel %vm354, %v714, 0
  %855 = vmatprep.subr.bf16.mxu0 %v816
  %856 = vmatpush1.bf16.msra.mxu0 %v815
  %857 = vmatprep.subr.bf16.mxu0 %v814
  %858 = vmatpush1.bf16.msra.mxu0 %v813
  %859 = vmatprep.subr.bf16.mxu0 %v812
  %860 = vmatpush1.bf16.msra.mxu0 %v811
  %861 = vmatprep.subr.bf16.mxu0 %v810
  %862 = vmatpush1.bf16.msra.mxu0 %v809
  %863 = vmatprep.subr.bf16.mxu0 %v808
  %864 = vmatpush1.bf16.msra.mxu0 %v807
  %865 = vmatprep.subr.bf16.mxu0 %v806
  %866 = vmatpush1.bf16.msra.mxu0 %v805
  %867 = vmatprep.subr.bf16.mxu0 %v804
  %868 = vmatpush1.bf16.msra.mxu0 %v803
  %869 = vmatprep.subr.bf16.mxu0 %v802
  %870 = vmatpush1.bf16.msra.mxu0 %v801
  %871 = vmatprep.subr.bf16.mxu0 0
  %872 = vmatpush2.bf16.msra.mxu0 0
  %873 = vmatprep.subr.bf16.mxu0 0
  %874 = vmatpush2.bf16.msra.mxu0 0
  %875 = vmatprep.subr.bf16.mxu0 0
  %876 = vmatpush2.bf16.msra.mxu0 0
  %877 = vmatprep.subr.bf16.mxu0 0
  %878 = vmatpush2.bf16.msra.mxu0 0
  %879 = vmatprep.subr.bf16.mxu0 %v824
  %880 = vmatpush2.bf16.msra.mxu0 %v823
  %881 = vmatprep.subr.bf16.mxu0 %v822
  %882 = vmatpush2.bf16.msra.mxu0 %v821
  %883 = vmatprep.subr.bf16.mxu0 %v820
  %884 = vmatpush2.bf16.msra.mxu0 %v819
  %885 = vmatprep.subr.bf16.mxu0 %v818
  %886 = vmatpush2.bf16.msra.mxu0 %v817
  %887 = vmatprep.mubr.bf16.mxu0 %v850
  %888 = vmatmul.mubr.bf16.gmra.mxu0 %v723
  %v889 = vpop.f32.mrf.mxu0
  %v890 = vadd.f32 0.0, %v889
  %v891 = vpop.f32.mrf.mxu0
  %v892 = vadd.f32 0.0, %v891
  %v893 = vpop.f32.mrf.mxu0
  %v894 = vadd.f32 0.0, %v893
  %v895 = vpop.f32.mrf.mxu0
  %v896 = vadd.f32 0.0, %v895
  %897 = vmatprep.mubr.bf16.mxu0 %v853
  %898 = vmatmul.mubr.bf16.gmra.mxu0 %v727
  %v899 = vpop.f32.mrf.mxu0
  %v900 = vadd.f32 0.0, %v899
  %v901 = vpop.f32.mrf.mxu0
  %v902 = vadd.f32 0.0, %v901
  %v903 = vpop.f32.mrf.mxu0
  %v904 = vadd.f32 0.0, %v903
  %v905 = vpop.f32.mrf.mxu0
  %v906 = vadd.f32 0.0, %v905
  %907 = vdwg.mxu0
  %v909 = vlaneseq
  %v910 = vshrl.u32 %v909, 7
  %v911 = vsub.s32 0, %v910
  %v912 = vrot.slane %v302, %v911
  %v913 = vlaneseq
  %v914 = vshrl.u32 %v913, 7
  %v915 = vsub.s32 1, %v914
  %v916 = vrot.slane %v302, %v915
  %v919 = vadd.f32 %v890, %v912
  %v920 = vadd.f32 %v892, %v916
  %v921 = vadd.f32 %v894, %v912
  %v922 = vadd.f32 %v896, %v916
  %v923 = vadd.f32 %v900, %v912
  %v924 = vadd.f32 %v902, %v916
  %v925 = vadd.f32 %v904, %v912
  %v926 = vadd.f32 %v906, %v916
  %v927 = vpack.c.bf16 %v921, %v919
  %v928 = vpack.c.bf16 %v925, %v923
  %v929 = vpack.c.bf16 %v922, %v920
  %v930 = vpack.c.bf16 %v926, %v924
  %v932 = vshrl.u32 %v929, 16
  %v934 = vrot.slane %v932, 7
  %v935 = vshll.u32 %v929, 16
  %v937 = vor.u32 %v934, %v935
  %v939 = vshrl.u32 %v930, 16
  %v941 = vrot.slane %v939, 7
  %v942 = vshll.u32 %v930, 16
  %v944 = vor.u32 %v941, %v942
  %v947 = vsel %vm332, %v929, %v937
  %v948 = vsel %vm332, %v930, %v944
  %v950 = vshrl.u32 %v927, 16
  %v952 = vshll.u32 %v927, 16
  %v954 = vrot.slane %v952, 1
  %v955 = vor.u32 %v950, %v954
  %v957 = vshrl.u32 %v928, 16
  %v959 = vshll.u32 %v928, 16
  %v961 = vrot.slane %v959, 1
  %v962 = vor.u32 %v957, %v961
  %v965 = vsel %vm345, %v955, %v927
  %v966 = vsel %vm345, %v962, %v928
  %v1015 = vunpack.c.l.b16 %v107
  %v1016 = vunpack.c.l.b16 %v108
  %v1017 = vunpack.c.l.b16 %v109
  %v1018 = vunpack.c.l.b16 %v110
  %v1019 = vunpack.c.l.b16 %v111
  %v1020 = vunpack.c.l.b16 %v112
  %v1021 = vunpack.c.l.b16 %v113
  %v1022 = vunpack.c.l.b16 %v114
  %v1023 = vunpack.c.l.b16 %v115
  %v1024 = vunpack.c.l.b16 %v116
  %v1025 = vunpack.c.l.b16 %v117
  %v1026 = vunpack.c.l.b16 %v118
  %v1027 = vunpack.c.l.b16 %v119
  %v1028 = vunpack.c.l.b16 %v120
  %v1029 = vunpack.c.l.b16 %v121
  %v1030 = vunpack.c.l.b16 %v122
  %v1031 = vunpack.c.l.b16 %v123
  %v1032 = vunpack.c.l.b16 %v124
  %v1033 = vunpack.c.l.b16 %v125
  %v1034 = vunpack.c.l.b16 %v126
  %v1035 = vunpack.c.l.b16 %v127
  %v1036 = vunpack.c.l.b16 %v128
  %v1037 = vunpack.c.l.b16 %v129
  %v1038 = vunpack.c.l.b16 %v130
  %v1039 = vunpack.c.l.b16 %v131
  %v1040 = vunpack.c.l.b16 %v132
  %v1041 = vunpack.c.l.b16 %v133
  %v1042 = vunpack.c.l.b16 %v134
  %v1043 = vunpack.c.l.b16 %v135
  %v1044 = vunpack.c.l.b16 %v136
  %v1045 = vunpack.c.l.b16 %v137
  %v1046 = vunpack.c.l.b16 %v138
  %v1047 = vunpack.c.l.b16 %v139
  %v1048 = vunpack.c.l.b16 %v140
  %v1049 = vunpack.c.l.b16 %v141
  %v1050 = vunpack.c.l.b16 %v142
  %v1051 = vunpack.c.l.b16 %v143
  %v1052 = vunpack.c.l.b16 %v144
  %v1053 = vunpack.c.l.b16 %v145
  %v1054 = vunpack.c.l.b16 %v146
  %v1055 = vunpack.c.l.b16 %v147
  %v1056 = vunpack.c.l.b16 %v148
  %v1057 = vunpack.c.l.b16 %v149
  %v1058 = vunpack.c.l.b16 %v150
  %v1059 = vunpack.c.l.b16 %v151
  %v1060 = vunpack.c.l.b16 %v152
  %v1061 = vunpack.c.l.b16 %v153
  %v1062 = vunpack.c.l.b16 %v154
  %v1063 = vpack.c.b16 %v1016, %v1015
  %v1064 = vpack.c.b16 %v1018, %v1017
  %v1065 = vpack.c.b16 %v1020, %v1019
  %v1066 = vpack.c.b16 %v1022, %v1021
  %v1067 = vpack.c.b16 %v1024, %v1023
  %v1068 = vpack.c.b16 %v1026, %v1025
  %v1069 = vpack.c.b16 %v1028, %v1027
  %v1070 = vpack.c.b16 %v1030, %v1029
  %v1071 = vpack.c.b16 %v1032, %v1031
  %v1072 = vpack.c.b16 %v1034, %v1033
  %v1073 = vpack.c.b16 %v1036, %v1035
  %v1074 = vpack.c.b16 %v1038, %v1037
  %v1075 = vpack.c.b16 %v1040, %v1039
  %v1076 = vpack.c.b16 %v1042, %v1041
  %v1077 = vpack.c.b16 %v1044, %v1043
  %v1078 = vpack.c.b16 %v1046, %v1045
  %v1079 = vpack.c.b16 %v1048, %v1047
  %v1080 = vpack.c.b16 %v1050, %v1049
  %v1081 = vpack.c.b16 %v1052, %v1051
  %v1082 = vpack.c.b16 %v1054, %v1053
  %v1083 = vpack.c.b16 %v1056, %v1055
  %v1084 = vpack.c.b16 %v1058, %v1057
  %v1085 = vpack.c.b16 %v1060, %v1059
  %v1086 = vpack.c.b16 %v1062, %v1061
  %1111 = vmatprep.subr.bf16.mxu0 0
  %1112 = vmatpush1.bf16.msra.mxu0 %v1070
  %1113 = vmatprep.subr.bf16.mxu0 0
  %1114 = vmatpush1.bf16.msra.mxu0 %v1069
  %1115 = vmatprep.subr.bf16.mxu0 0
  %1116 = vmatpush1.bf16.msra.mxu0 %v1068
  %1117 = vmatprep.subr.bf16.mxu0 0
  %1118 = vmatpush1.bf16.msra.mxu0 %v1067
  %1119 = vmatprep.subr.bf16.mxu0 0
  %1120 = vmatpush1.bf16.msra.mxu0 %v1066
  %1121 = vmatprep.subr.bf16.mxu0 0
  %1122 = vmatpush1.bf16.msra.mxu0 %v1065
  %1123 = vmatprep.subr.bf16.mxu0 0
  %1124 = vmatpush1.bf16.msra.mxu0 %v1064
  %1125 = vmatprep.subr.bf16.mxu0 0
  %1126 = vmatpush1.bf16.msra.mxu0 %v1063
  %1127 = vmatprep.subr.bf16.mxu0 0
  %1128 = vmatpush2.bf16.msra.mxu0 %v1078
  %1129 = vmatprep.subr.bf16.mxu0 0
  %1130 = vmatpush2.bf16.msra.mxu0 %v1077
  %1131 = vmatprep.subr.bf16.mxu0 0
  %1132 = vmatpush2.bf16.msra.mxu0 %v1076
  %1133 = vmatprep.subr.bf16.mxu0 0
  %1134 = vmatpush2.bf16.msra.mxu0 %v1075
  %1135 = vmatprep.subr.bf16.mxu0 0
  %1136 = vmatpush2.bf16.msra.mxu0 %v1074
  %1137 = vmatprep.subr.bf16.mxu0 0
  %1138 = vmatpush2.bf16.msra.mxu0 %v1073
  %1139 = vmatprep.subr.bf16.mxu0 0
  %1140 = vmatpush2.bf16.msra.mxu0 %v1072
  %1141 = vmatprep.subr.bf16.mxu0 0
  %1142 = vmatpush2.bf16.msra.mxu0 %v1071
  %1143 = vmatprep.mubr.bf16.mxu0 %v927
  %1144 = vmatmul.mubr.bf16.gmra.mxu0 %v947
  %v1145 = vpop.f32.mrf.mxu0
  %v1146 = vadd.f32 0.0, %v1145
  %v1147 = vpop.f32.mrf.mxu0
  %v1148 = vpop.f32.mrf.mxu0
  %v1149 = vadd.f32 0.0, %v1148
  %v1150 = vpop.f32.mrf.mxu0
  %1151 = vmatprep.mubr.bf16.mxu0 %v929
  %1152 = vmatmul.mubr.bf16.gmra.mxu0 %v927
  %v1153 = vpop.f32.mrf.mxu0
  %v1154 = vadd.f32 0.0, %v1153
  %v1155 = vpop.f32.mrf.mxu0
  %v1156 = vpop.f32.mrf.mxu0
  %v1157 = vadd.f32 0.0, %v1156
  %v1158 = vpop.f32.mrf.mxu0
  %1159 = vmatprep.mubr.bf16.mxu0 %v928
  %1160 = vmatmul.mubr.bf16.gmra.mxu0 %v948
  %v1161 = vpop.f32.mrf.mxu0
  %v1162 = vadd.f32 0.0, %v1161
  %v1163 = vpop.f32.mrf.mxu0
  %v1164 = vpop.f32.mrf.mxu0
  %v1165 = vadd.f32 0.0, %v1164
  %v1166 = vpop.f32.mrf.mxu0
  %1167 = vmatprep.mubr.bf16.mxu0 %v930
  %1168 = vmatmul.mubr.bf16.gmra.mxu0 %v928
  %v1169 = vpop.f32.mrf.mxu0
  %v1170 = vadd.f32 0.0, %v1169
  %v1171 = vpop.f32.mrf.mxu0
  %v1172 = vpop.f32.mrf.mxu0
  %v1173 = vadd.f32 0.0, %v1172
  %v1174 = vpop.f32.mrf.mxu0
  %1175 = vdwg.mxu0
  %1176 = vmatprep.subr.bf16.mxu0 0
  %1177 = vmatpush1.bf16.msra.mxu0 %v1086
  %1178 = vmatprep.subr.bf16.mxu0 0
  %1179 = vmatpush1.bf16.msra.mxu0 %v1085
  %1180 = vmatprep.subr.bf16.mxu0 0
  %1181 = vmatpush1.bf16.msra.mxu0 %v1084
  %1182 = vmatprep.subr.bf16.mxu0 0
  %1183 = vmatpush1.bf16.msra.mxu0 %v1083
  %1184 = vmatprep.subr.bf16.mxu0 0
  %1185 = vmatpush1.bf16.msra.mxu0 %v1082
  %1186 = vmatprep.subr.bf16.mxu0 0
  %1187 = vmatpush1.bf16.msra.mxu0 %v1081
  %1188 = vmatprep.subr.bf16.mxu0 0
  %1189 = vmatpush1.bf16.msra.mxu0 %v1080
  %1190 = vmatprep.subr.bf16.mxu0 0
  %1191 = vmatpush1.bf16.msra.mxu0 %v1079
  %1192 = vmatprep.subr.bf16.mxu0 0
  %1193 = vmatpush2.bf16.msra.mxu0 0
  %1194 = vmatprep.subr.bf16.mxu0 0
  %1195 = vmatpush2.bf16.msra.mxu0 0
  %1196 = vmatprep.subr.bf16.mxu0 0
  %1197 = vmatpush2.bf16.msra.mxu0 0
  %1198 = vmatprep.subr.bf16.mxu0 0
  %1199 = vmatpush2.bf16.msra.mxu0 0
  %1200 = vmatprep.subr.bf16.mxu0 0
  %1201 = vmatpush2.bf16.msra.mxu0 0
  %1202 = vmatprep.subr.bf16.mxu0 0
  %1203 = vmatpush2.bf16.msra.mxu0 0
  %1204 = vmatprep.subr.bf16.mxu0 0
  %1205 = vmatpush2.bf16.msra.mxu0 0
  %1206 = vmatprep.subr.bf16.mxu0 0
  %1207 = vmatpush2.bf16.msra.mxu0 0
  %1208 = vmatprep.mubr.bf16.mxu0 0
  %1209 = vmatmul.mubr.bf16.gmra.mxu0 %v929
  %v1210 = vpop.f32.mrf.mxu0
  %v1211 = vadd.f32 %v1146, %v1210
  %v1212 = vpop.f32.mrf.mxu0
  %v1213 = vpop.f32.mrf.mxu0
  %v1214 = vadd.f32 %v1149, %v1213
  %v1215 = vpop.f32.mrf.mxu0
  %1216 = vmatprep.mubr.bf16.mxu0 0
  %1217 = vmatmul.mubr.bf16.gmra.mxu0 %v965
  %v1218 = vpop.f32.mrf.mxu0
  %v1219 = vadd.f32 %v1154, %v1218
  %v1220 = vpop.f32.mrf.mxu0
  %v1221 = vpop.f32.mrf.mxu0
  %v1222 = vadd.f32 %v1157, %v1221
  %v1223 = vpop.f32.mrf.mxu0
  %1224 = vmatprep.mubr.bf16.mxu0 0
  %1225 = vmatmul.mubr.bf16.gmra.mxu0 %v930
  %v1226 = vpop.f32.mrf.mxu0
  %v1227 = vadd.f32 %v1162, %v1226
  %v1228 = vpop.f32.mrf.mxu0
  %v1229 = vpop.f32.mrf.mxu0
  %v1230 = vadd.f32 %v1165, %v1229
  %v1231 = vpop.f32.mrf.mxu0
  %1232 = vmatprep.mubr.bf16.mxu0 0
  %1233 = vmatmul.mubr.bf16.gmra.mxu0 %v966
  %v1234 = vpop.f32.mrf.mxu0
  %v1235 = vadd.f32 %v1170, %v1234
  %v1236 = vpop.f32.mrf.mxu0
  %v1237 = vpop.f32.mrf.mxu0
  %v1238 = vadd.f32 %v1173, %v1237
  %v1239 = vpop.f32.mrf.mxu0
  %1240 = vdwg.mxu0
  %v1241 = vadd.f32 %v1211, %v303
  %v1242 = vadd.f32 %v1214, %v303
  %v1243 = vadd.f32 %v1219, %v303
  %v1244 = vadd.f32 %v1222, %v303
  %v1245 = vadd.f32 %v1227, %v303
  %v1246 = vadd.f32 %v1230, %v303
  %v1247 = vadd.f32 %v1235, %v303
  %v1248 = vadd.f32 %v1238, %v303
  %v1249 = vadd.f32 %v1241, %v27
  %v1250 = vadd.f32 %v1242, %v28
  %v1251 = vadd.f32 %v1245, %v29
  %v1252 = vadd.f32 %v1246, %v30
  %v1253 = vmax.f32 %v1249, 0.0
  %v1254 = vmax.f32 %v1250, 0.0
  %v1255 = vmax.f32 %v1251, 0.0
  %v1256 = vmax.f32 %v1252, 0.0
  %v1257 = vadd.f32 %v1243, %v31
  %v1258 = vadd.f32 %v1244, %v32
  %v1259 = vadd.f32 %v1247, %v33
  %v1260 = vadd.f32 %v1248, %v34
  %v1261 = vmax.f32 %v1257, 0.0
  %v1262 = vmax.f32 %v1258, 0.0
  %v1263 = vmax.f32 %v1259, 0.0
  %v1264 = vmax.f32 %v1260, 0.0
  %1265 = vst [vmem:[%s6] sm:$0xff] %v1253
  %1266 = vst [vmem:[%s6 + $0x10] sm:$0xff] %v1254
  %1267 = vst [vmem:[%s6 + $0x20] sm:$0xff] %v1255
  %1268 = vst [vmem:[%s6 + $0x30] sm:$0xff] %v1256
  %1269 = vst [vmem:[%s6 + $0x8] sm:$0xff] %v1261
  %1270 = vst [vmem:[%s6 + $0x18] sm:$0xff] %v1262
  %1271 = vst [vmem:[%s6 + $0x28] sm:$0xff] %v1263
  %1272 = vst [vmem:[%s6 + $0x38] sm:$0xff] %v1264
  %v1273 = vpack.c.bf16 %v1254, %v1253
  %v1274 = vpack.c.bf16 %v1256, %v1255
  %v1275 = vpack.c.bf16 %v1262, %v1261
  %v1276 = vpack.c.bf16 %v1264, %v1263
  %v1278 = vshrl.u32 %v1275, 16
  %v1280 = vrot.slane %v1278, 7
  %v1281 = vshll.u32 %v1275, 16
  %v1283 = vor.u32 %v1280, %v1281
  %v1285 = vshrl.u32 %v1276, 16
  %v1287 = vrot.slane %v1285, 7
  %v1288 = vshll.u32 %v1276, 16
  %v1290 = vor.u32 %v1287, %v1288
  %v1293 = vsel %vm332, 0, %v1283
  %v1294 = vsel %vm332, 0, %v1290
  %v1296 = vshrl.u32 %v1273, 16
  %v1298 = vshll.u32 %v1273, 16
  %v1300 = vrot.slane %v1298, 1
  %v1301 = vor.u32 %v1296, %v1300
  %v1303 = vshrl.u32 %v1274, 16
  %v1305 = vshll.u32 %v1274, 16
  %v1307 = vrot.slane %v1305, 1
  %v1308 = vor.u32 %v1303, %v1307
  %v1311 = vsel %vm345, %v1301, 0
  %v1312 = vsel %vm345, %v1308, 0
  %v1361 = vunpack.c.l.b16 %v155
  %v1362 = vunpack.c.l.b16 %v156
  %v1363 = vunpack.c.l.b16 %v157
  %v1364 = vunpack.c.l.b16 %v158
  %v1365 = vunpack.c.l.b16 %v159
  %v1366 = vunpack.c.l.b16 %v160
  %v1367 = vunpack.c.l.b16 %v161
  %v1368 = vunpack.c.l.b16 %v162
  %v1369 = vunpack.c.l.b16 %v163
  %v1370 = vunpack.c.l.b16 %v164
  %v1371 = vunpack.c.l.b16 %v165
  %v1372 = vunpack.c.l.b16 %v166
  %v1373 = vunpack.c.l.b16 %v167
  %v1374 = vunpack.c.l.b16 %v168
  %v1375 = vunpack.c.l.b16 %v169
  %v1376 = vunpack.c.l.b16 %v170
  %v1377 = vunpack.c.l.b16 %v171
  %v1378 = vunpack.c.l.b16 %v172
  %v1379 = vunpack.c.l.b16 %v173
  %v1380 = vunpack.c.l.b16 %v174
  %v1381 = vunpack.c.l.b16 %v175
  %v1382 = vunpack.c.l.b16 %v176
  %v1383 = vunpack.c.l.b16 %v177
  %v1384 = vunpack.c.l.b16 %v178
  %v1385 = vunpack.c.l.b16 %v179
  %v1386 = vunpack.c.l.b16 %v180
  %v1387 = vunpack.c.l.b16 %v181
  %v1388 = vunpack.c.l.b16 %v182
  %v1389 = vunpack.c.l.b16 %v183
  %v1390 = vunpack.c.l.b16 %v184
  %v1391 = vunpack.c.l.b16 %v185
  %v1392 = vunpack.c.l.b16 %v186
  %v1393 = vunpack.c.l.b16 %v187
  %v1394 = vunpack.c.l.b16 %v188
  %v1395 = vunpack.c.l.b16 %v189
  %v1396 = vunpack.c.l.b16 %v190
  %v1397 = vunpack.c.l.b16 %v191
  %v1398 = vunpack.c.l.b16 %v192
  %v1399 = vunpack.c.l.b16 %v193
  %v1400 = vunpack.c.l.b16 %v194
  %v1401 = vunpack.c.l.b16 %v195
  %v1402 = vunpack.c.l.b16 %v196
  %v1403 = vunpack.c.l.b16 %v197
  %v1404 = vunpack.c.l.b16 %v198
  %v1405 = vunpack.c.l.b16 %v199
  %v1406 = vunpack.c.l.b16 %v200
  %v1407 = vunpack.c.l.b16 %v201
  %v1408 = vunpack.c.l.b16 %v202
  %v1409 = vpack.c.b16 %v1362, %v1361
  %v1410 = vpack.c.b16 %v1364, %v1363
  %v1411 = vpack.c.b16 %v1366, %v1365
  %v1412 = vpack.c.b16 %v1368, %v1367
  %v1413 = vpack.c.b16 %v1370, %v1369
  %v1414 = vpack.c.b16 %v1372, %v1371
  %v1415 = vpack.c.b16 %v1374, %v1373
  %v1416 = vpack.c.b16 %v1376, %v1375
  %v1417 = vpack.c.b16 %v1378, %v1377
  %v1418 = vpack.c.b16 %v1380, %v1379
  %v1419 = vpack.c.b16 %v1382, %v1381
  %v1420 = vpack.c.b16 %v1384, %v1383
  %v1421 = vpack.c.b16 %v1386, %v1385
  %v1422 = vpack.c.b16 %v1388, %v1387
  %v1423 = vpack.c.b16 %v1390, %v1389
  %v1424 = vpack.c.b16 %v1392, %v1391
  %v1425 = vpack.c.b16 %v1394, %v1393
  %v1426 = vpack.c.b16 %v1396, %v1395
  %v1427 = vpack.c.b16 %v1398, %v1397
  %v1428 = vpack.c.b16 %v1400, %v1399
  %v1429 = vpack.c.b16 %v1402, %v1401
  %v1430 = vpack.c.b16 %v1404, %v1403
  %v1431 = vpack.c.b16 %v1406, %v1405
  %v1432 = vpack.c.b16 %v1408, %v1407
  %1457 = vmatprep.subr.bf16.mxu0 0
  %1458 = vmatpush1.bf16.msra.mxu0 %v1416
  %1459 = vmatprep.subr.bf16.mxu0 0
  %1460 = vmatpush1.bf16.msra.mxu0 %v1415
  %1461 = vmatprep.subr.bf16.mxu0 0
  %1462 = vmatpush1.bf16.msra.mxu0 %v1414
  %1463 = vmatprep.subr.bf16.mxu0 0
  %1464 = vmatpush1.bf16.msra.mxu0 %v1413
  %1465 = vmatprep.subr.bf16.mxu0 0
  %1466 = vmatpush1.bf16.msra.mxu0 %v1412
  %1467 = vmatprep.subr.bf16.mxu0 0
  %1468 = vmatpush1.bf16.msra.mxu0 %v1411
  %1469 = vmatprep.subr.bf16.mxu0 0
  %1470 = vmatpush1.bf16.msra.mxu0 %v1410
  %1471 = vmatprep.subr.bf16.mxu0 0
  %1472 = vmatpush1.bf16.msra.mxu0 %v1409
  %1473 = vmatprep.subr.bf16.mxu0 0
  %1474 = vmatpush2.bf16.msra.mxu0 %v1424
  %1475 = vmatprep.subr.bf16.mxu0 0
  %1476 = vmatpush2.bf16.msra.mxu0 %v1423
  %1477 = vmatprep.subr.bf16.mxu0 0
  %1478 = vmatpush2.bf16.msra.mxu0 %v1422
  %1479 = vmatprep.subr.bf16.mxu0 0
  %1480 = vmatpush2.bf16.msra.mxu0 %v1421
  %1481 = vmatprep.subr.bf16.mxu0 0
  %1482 = vmatpush2.bf16.msra.mxu0 %v1420
  %1483 = vmatprep.subr.bf16.mxu0 0
  %1484 = vmatpush2.bf16.msra.mxu0 %v1419
  %1485 = vmatprep.subr.bf16.mxu0 0
  %1486 = vmatpush2.bf16.msra.mxu0 %v1418
  %1487 = vmatprep.subr.bf16.mxu0 0
  %1488 = vmatpush2.bf16.msra.mxu0 %v1417
  %1489 = vmatprep.mubr.bf16.mxu0 %v1273
  %1490 = vmatmul.mubr.bf16.gmra.mxu0 %v1293
  %v1491 = vpop.f32.mrf.mxu0
  %v1492 = vadd.f32 0.0, %v1491
  %v1493 = vpop.f32.mrf.mxu0
  %v1494 = vpop.f32.mrf.mxu0
  %v1495 = vadd.f32 0.0, %v1494
  %v1496 = vpop.f32.mrf.mxu0
  %1497 = vmatprep.mubr.bf16.mxu0 %v1275
  %1498 = vmatmul.mubr.bf16.gmra.mxu0 %v1273
  %v1499 = vpop.f32.mrf.mxu0
  %v1500 = vadd.f32 0.0, %v1499
  %v1501 = vpop.f32.mrf.mxu0
  %v1502 = vpop.f32.mrf.mxu0
  %v1503 = vadd.f32 0.0, %v1502
  %v1504 = vpop.f32.mrf.mxu0
  %1505 = vmatprep.mubr.bf16.mxu0 %v1274
  %1506 = vmatmul.mubr.bf16.gmra.mxu0 %v1294
  %v1507 = vpop.f32.mrf.mxu0
  %v1508 = vadd.f32 0.0, %v1507
  %v1509 = vpop.f32.mrf.mxu0
  %v1510 = vpop.f32.mrf.mxu0
  %v1511 = vadd.f32 0.0, %v1510
  %v1512 = vpop.f32.mrf.mxu0
  %1513 = vmatprep.mubr.bf16.mxu0 %v1276
  %1514 = vmatmul.mubr.bf16.gmra.mxu0 %v1274
  %v1515 = vpop.f32.mrf.mxu0
  %v1516 = vadd.f32 0.0, %v1515
  %v1517 = vpop.f32.mrf.mxu0
  %v1518 = vpop.f32.mrf.mxu0
  %v1519 = vadd.f32 0.0, %v1518
  %v1520 = vpop.f32.mrf.mxu0
  %1521 = vdwg.mxu0
  %1522 = vmatprep.subr.bf16.mxu0 0
  %1523 = vmatpush1.bf16.msra.mxu0 %v1432
  %1524 = vmatprep.subr.bf16.mxu0 0
  %1525 = vmatpush1.bf16.msra.mxu0 %v1431
  %1526 = vmatprep.subr.bf16.mxu0 0
  %1527 = vmatpush1.bf16.msra.mxu0 %v1430
  %1528 = vmatprep.subr.bf16.mxu0 0
  %1529 = vmatpush1.bf16.msra.mxu0 %v1429
  %1530 = vmatprep.subr.bf16.mxu0 0
  %1531 = vmatpush1.bf16.msra.mxu0 %v1428
  %1532 = vmatprep.subr.bf16.mxu0 0
  %1533 = vmatpush1.bf16.msra.mxu0 %v1427
  %1534 = vmatprep.subr.bf16.mxu0 0
  %1535 = vmatpush1.bf16.msra.mxu0 %v1426
  %1536 = vmatprep.subr.bf16.mxu0 0
  %1537 = vmatpush1.bf16.msra.mxu0 %v1425
  %1538 = vmatprep.subr.bf16.mxu0 0
  %1539 = vmatpush2.bf16.msra.mxu0 0
  %1540 = vmatprep.subr.bf16.mxu0 0
  %1541 = vmatpush2.bf16.msra.mxu0 0
  %1542 = vmatprep.subr.bf16.mxu0 0
  %1543 = vmatpush2.bf16.msra.mxu0 0
  %1544 = vmatprep.subr.bf16.mxu0 0
  %1545 = vmatpush2.bf16.msra.mxu0 0
  %1546 = vmatprep.subr.bf16.mxu0 0
  %1547 = vmatpush2.bf16.msra.mxu0 0
  %1548 = vmatprep.subr.bf16.mxu0 0
  %1549 = vmatpush2.bf16.msra.mxu0 0
  %1550 = vmatprep.subr.bf16.mxu0 0
  %1551 = vmatpush2.bf16.msra.mxu0 0
  %1552 = vmatprep.subr.bf16.mxu0 0
  %1553 = vmatpush2.bf16.msra.mxu0 0
  %1554 = vmatprep.mubr.bf16.mxu0 0
  %1555 = vmatmul.mubr.bf16.gmra.mxu0 %v1275
  %v1556 = vpop.f32.mrf.mxu0
  %v1557 = vadd.f32 %v1492, %v1556
  %v1558 = vpop.f32.mrf.mxu0
  %v1559 = vpop.f32.mrf.mxu0
  %v1560 = vadd.f32 %v1495, %v1559
  %v1561 = vpop.f32.mrf.mxu0
  %1562 = vmatprep.mubr.bf16.mxu0 0
  %1563 = vmatmul.mubr.bf16.gmra.mxu0 %v1311
  %v1564 = vpop.f32.mrf.mxu0
  %v1565 = vadd.f32 %v1500, %v1564
  %v1566 = vpop.f32.mrf.mxu0
  %v1567 = vpop.f32.mrf.mxu0
  %v1568 = vadd.f32 %v1503, %v1567
  %v1569 = vpop.f32.mrf.mxu0
  %1570 = vmatprep.mubr.bf16.mxu0 0
  %1571 = vmatmul.mubr.bf16.gmra.mxu0 %v1276
  %v1572 = vpop.f32.mrf.mxu0
  %v1573 = vadd.f32 %v1508, %v1572
  %v1574 = vpop.f32.mrf.mxu0
  %v1575 = vpop.f32.mrf.mxu0
  %v1576 = vadd.f32 %v1511, %v1575
  %v1577 = vpop.f32.mrf.mxu0
  %1578 = vmatprep.mubr.bf16.mxu0 0
  %1579 = vmatmul.mubr.bf16.gmra.mxu0 %v1312
  %v1580 = vpop.f32.mrf.mxu0
  %v1581 = vadd.f32 %v1516, %v1580
  %v1582 = vpop.f32.mrf.mxu0
  %v1583 = vpop.f32.mrf.mxu0
  %v1584 = vadd.f32 %v1519, %v1583
  %v1585 = vpop.f32.mrf.mxu0
  %1586 = vdwg.mxu0
  %v1587 = vmax.f32 %v1557, 0.0
  %v1588 = vmax.f32 %v1560, 0.0
  %v1589 = vmax.f32 %v1573, 0.0
  %v1590 = vmax.f32 %v1576, 0.0
  %v1591 = vmax.f32 %v1565, 0.0
  %v1592 = vmax.f32 %v1568, 0.0
  %v1593 = vmax.f32 %v1581, 0.0
  %v1594 = vmax.f32 %v1584, 0.0
  %v1595 = vpack.c.bf16 %v1588, %v1587
  %v1596 = vpack.c.bf16 %v1590, %v1589
  %v1597 = vpack.c.bf16 %v1592, %v1591
  %v1598 = vpack.c.bf16 %v1594, %v1593
  %v1600 = vshrl.u32 %v1597, 16
  %v1602 = vrot.slane %v1600, 7
  %v1603 = vshll.u32 %v1597, 16
  %v1605 = vor.u32 %v1602, %v1603
  %v1607 = vshrl.u32 %v1598, 16
  %v1609 = vrot.slane %v1607, 7
  %v1610 = vshll.u32 %v1598, 16
  %v1612 = vor.u32 %v1609, %v1610
  %v1615 = vsel %vm332, 0, %v1605
  %v1616 = vsel %vm332, 0, %v1612
  %v1618 = vshrl.u32 %v1595, 16
  %v1620 = vshll.u32 %v1595, 16
  %v1622 = vrot.slane %v1620, 1
  %v1623 = vor.u32 %v1618, %v1622
  %v1625 = vshrl.u32 %v1596, 16
  %v1627 = vshll.u32 %v1596, 16
  %v1629 = vrot.slane %v1627, 1
  %v1630 = vor.u32 %v1625, %v1629
  %v1633 = vsel %vm345, %v1623, 0
  %v1634 = vsel %vm345, %v1630, 0
  %v1683 = vunpack.c.l.b16 %v203
  %v1684 = vunpack.c.l.b16 %v204
  %v1685 = vunpack.c.l.b16 %v205
  %v1686 = vunpack.c.l.b16 %v206
  %v1687 = vunpack.c.l.b16 %v207
  %v1688 = vunpack.c.l.b16 %v208
  %v1689 = vunpack.c.l.b16 %v209
  %v1690 = vunpack.c.l.b16 %v210
  %v1691 = vunpack.c.l.b16 %v211
  %v1692 = vunpack.c.l.b16 %v212
  %v1693 = vunpack.c.l.b16 %v213
  %v1694 = vunpack.c.l.b16 %v214
  %v1695 = vunpack.c.l.b16 %v215
  %v1696 = vunpack.c.l.b16 %v216
  %v1697 = vunpack.c.l.b16 %v217
  %v1698 = vunpack.c.l.b16 %v218
  %v1699 = vunpack.c.l.b16 %v219
  %v1700 = vunpack.c.l.b16 %v220
  %v1701 = vunpack.c.l.b16 %v221
  %v1702 = vunpack.c.l.b16 %v222
  %v1703 = vunpack.c.l.b16 %v223
  %v1704 = vunpack.c.l.b16 %v224
  %v1705 = vunpack.c.l.b16 %v225
  %v1706 = vunpack.c.l.b16 %v226
  %v1707 = vunpack.c.l.b16 %v227
  %v1708 = vunpack.c.l.b16 %v228
  %v1709 = vunpack.c.l.b16 %v229
  %v1710 = vunpack.c.l.b16 %v230
  %v1711 = vunpack.c.l.b16 %v231
  %v1712 = vunpack.c.l.b16 %v232
  %v1713 = vunpack.c.l.b16 %v233
  %v1714 = vunpack.c.l.b16 %v234
  %v1715 = vunpack.c.l.b16 %v235
  %v1716 = vunpack.c.l.b16 %v236
  %v1717 = vunpack.c.l.b16 %v237
  %v1718 = vunpack.c.l.b16 %v238
  %v1719 = vunpack.c.l.b16 %v239
  %v1720 = vunpack.c.l.b16 %v240
  %v1721 = vunpack.c.l.b16 %v241
  %v1722 = vunpack.c.l.b16 %v242
  %v1723 = vunpack.c.l.b16 %v243
  %v1724 = vunpack.c.l.b16 %v244
  %v1725 = vunpack.c.l.b16 %v245
  %v1726 = vunpack.c.l.b16 %v246
  %v1727 = vunpack.c.l.b16 %v247
  %v1728 = vunpack.c.l.b16 %v248
  %v1729 = vunpack.c.l.b16 %v249
  %v1730 = vunpack.c.l.b16 %v250
  %v1731 = vpack.c.b16 %v1684, %v1683
  %v1732 = vpack.c.b16 %v1686, %v1685
  %v1733 = vpack.c.b16 %v1688, %v1687
  %v1734 = vpack.c.b16 %v1690, %v1689
  %v1735 = vpack.c.b16 %v1692, %v1691
  %v1736 = vpack.c.b16 %v1694, %v1693
  %v1737 = vpack.c.b16 %v1696, %v1695
  %v1738 = vpack.c.b16 %v1698, %v1697
  %v1739 = vpack.c.b16 %v1700, %v1699
  %v1740 = vpack.c.b16 %v1702, %v1701
  %v1741 = vpack.c.b16 %v1704, %v1703
  %v1742 = vpack.c.b16 %v1706, %v1705
  %v1743 = vpack.c.b16 %v1708, %v1707
  %v1744 = vpack.c.b16 %v1710, %v1709
  %v1745 = vpack.c.b16 %v1712, %v1711
  %v1746 = vpack.c.b16 %v1714, %v1713
  %v1747 = vpack.c.b16 %v1716, %v1715
  %v1748 = vpack.c.b16 %v1718, %v1717
  %v1749 = vpack.c.b16 %v1720, %v1719
  %v1750 = vpack.c.b16 %v1722, %v1721
  %v1751 = vpack.c.b16 %v1724, %v1723
  %v1752 = vpack.c.b16 %v1726, %v1725
  %v1753 = vpack.c.b16 %v1728, %v1727
  %v1754 = vpack.c.b16 %v1730, %v1729
  %1779 = vmatprep.subr.bf16.mxu0 0
  %1780 = vmatpush1.bf16.msra.mxu0 %v1738
  %1781 = vmatprep.subr.bf16.mxu0 0
  %1782 = vmatpush1.bf16.msra.mxu0 %v1737
  %1783 = vmatprep.subr.bf16.mxu0 0
  %1784 = vmatpush1.bf16.msra.mxu0 %v1736
  %1785 = vmatprep.subr.bf16.mxu0 0
  %1786 = vmatpush1.bf16.msra.mxu0 %v1735
  %1787 = vmatprep.subr.bf16.mxu0 0
  %1788 = vmatpush1.bf16.msra.mxu0 %v1734
  %1789 = vmatprep.subr.bf16.mxu0 0
  %1790 = vmatpush1.bf16.msra.mxu0 %v1733
  %1791 = vmatprep.subr.bf16.mxu0 0
  %1792 = vmatpush1.bf16.msra.mxu0 %v1732
  %1793 = vmatprep.subr.bf16.mxu0 0
  %1794 = vmatpush1.bf16.msra.mxu0 %v1731
  %1795 = vmatprep.subr.bf16.mxu0 0
  %1796 = vmatpush2.bf16.msra.mxu0 %v1746
  %1797 = vmatprep.subr.bf16.mxu0 0
  %1798 = vmatpush2.bf16.msra.mxu0 %v1745
  %1799 = vmatprep.subr.bf16.mxu0 0
  %1800 = vmatpush2.bf16.msra.mxu0 %v1744
  %1801 = vmatprep.subr.bf16.mxu0 0
  %1802 = vmatpush2.bf16.msra.mxu0 %v1743
  %1803 = vmatprep.subr.bf16.mxu0 0
  %1804 = vmatpush2.bf16.msra.mxu0 %v1742
  %1805 = vmatprep.subr.bf16.mxu0 0
  %1806 = vmatpush2.bf16.msra.mxu0 %v1741
  %1807 = vmatprep.subr.bf16.mxu0 0
  %1808 = vmatpush2.bf16.msra.mxu0 %v1740
  %1809 = vmatprep.subr.bf16.mxu0 0
  %1810 = vmatpush2.bf16.msra.mxu0 %v1739
  %1811 = vmatprep.mubr.bf16.mxu0 %v1595
  %1812 = vmatmul.mubr.bf16.gmra.mxu0 %v1615
  %v1813 = vpop.f32.mrf.mxu0
  %v1814 = vadd.f32 0.0, %v1813
  %v1815 = vpop.f32.mrf.mxu0
  %v1816 = vpop.f32.mrf.mxu0
  %v1817 = vadd.f32 0.0, %v1816
  %v1818 = vpop.f32.mrf.mxu0
  %1819 = vmatprep.mubr.bf16.mxu0 %v1597
  %1820 = vmatmul.mubr.bf16.gmra.mxu0 %v1595
  %v1821 = vpop.f32.mrf.mxu0
  %v1822 = vadd.f32 0.0, %v1821
  %v1823 = vpop.f32.mrf.mxu0
  %v1824 = vpop.f32.mrf.mxu0
  %v1825 = vadd.f32 0.0, %v1824
  %v1826 = vpop.f32.mrf.mxu0
  %1827 = vmatprep.mubr.bf16.mxu0 %v1596
  %1828 = vmatmul.mubr.bf16.gmra.mxu0 %v1616
  %v1829 = vpop.f32.mrf.mxu0
  %v1830 = vadd.f32 0.0, %v1829
  %v1831 = vpop.f32.mrf.mxu0
  %v1832 = vpop.f32.mrf.mxu0
  %v1833 = vadd.f32 0.0, %v1832
  %v1834 = vpop.f32.mrf.mxu0
  %1835 = vmatprep.mubr.bf16.mxu0 %v1598
  %1836 = vmatmul.mubr.bf16.gmra.mxu0 %v1596
  %v1837 = vpop.f32.mrf.mxu0
  %v1838 = vadd.f32 0.0, %v1837
  %v1839 = vpop.f32.mrf.mxu0
  %v1840 = vpop.f32.mrf.mxu0
  %v1841 = vadd.f32 0.0, %v1840
  %v1842 = vpop.f32.mrf.mxu0
  %1843 = vdwg.mxu0
  %1844 = vmatprep.subr.bf16.mxu0 0
  %1845 = vmatpush1.bf16.msra.mxu0 %v1754
  %1846 = vmatprep.subr.bf16.mxu0 0
  %1847 = vmatpush1.bf16.msra.mxu0 %v1753
  %1848 = vmatprep.subr.bf16.mxu0 0
  %1849 = vmatpush1.bf16.msra.mxu0 %v1752
  %1850 = vmatprep.subr.bf16.mxu0 0
  %1851 = vmatpush1.bf16.msra.mxu0 %v1751
  %1852 = vmatprep.subr.bf16.mxu0 0
  %1853 = vmatpush1.bf16.msra.mxu0 %v1750
  %1854 = vmatprep.subr.bf16.mxu0 0
  %1855 = vmatpush1.bf16.msra.mxu0 %v1749
  %1856 = vmatprep.subr.bf16.mxu0 0
  %1857 = vmatpush1.bf16.msra.mxu0 %v1748
  %1858 = vmatprep.subr.bf16.mxu0 0
  %1859 = vmatpush1.bf16.msra.mxu0 %v1747
  %1860 = vmatprep.subr.bf16.mxu0 0
  %1861 = vmatpush2.bf16.msra.mxu0 0
  %1862 = vmatprep.subr.bf16.mxu0 0
  %1863 = vmatpush2.bf16.msra.mxu0 0
  %1864 = vmatprep.subr.bf16.mxu0 0
  %1865 = vmatpush2.bf16.msra.mxu0 0
  %1866 = vmatprep.subr.bf16.mxu0 0
  %1867 = vmatpush2.bf16.msra.mxu0 0
  %1868 = vmatprep.subr.bf16.mxu0 0
  %1869 = vmatpush2.bf16.msra.mxu0 0
  %1870 = vmatprep.subr.bf16.mxu0 0
  %1871 = vmatpush2.bf16.msra.mxu0 0
  %1872 = vmatprep.subr.bf16.mxu0 0
  %1873 = vmatpush2.bf16.msra.mxu0 0
  %1874 = vmatprep.subr.bf16.mxu0 0
  %1875 = vmatpush2.bf16.msra.mxu0 0
  %1876 = vmatprep.mubr.bf16.mxu0 0
  %1877 = vmatmul.mubr.bf16.gmra.mxu0 %v1597
  %v1878 = vpop.f32.mrf.mxu0
  %v1879 = vadd.f32 %v1814, %v1878
  %v1880 = vpop.f32.mrf.mxu0
  %v1881 = vpop.f32.mrf.mxu0
  %v1882 = vadd.f32 %v1817, %v1881
  %v1883 = vpop.f32.mrf.mxu0
  %1884 = vmatprep.mubr.bf16.mxu0 0
  %1885 = vmatmul.mubr.bf16.gmra.mxu0 %v1633
  %v1886 = vpop.f32.mrf.mxu0
  %v1887 = vadd.f32 %v1822, %v1886
  %v1888 = vpop.f32.mrf.mxu0
  %v1889 = vpop.f32.mrf.mxu0
  %v1890 = vadd.f32 %v1825, %v1889
  %v1891 = vpop.f32.mrf.mxu0
  %1892 = vmatprep.mubr.bf16.mxu0 0
  %1893 = vmatmul.mubr.bf16.gmra.mxu0 %v1598
  %v1894 = vpop.f32.mrf.mxu0
  %v1895 = vadd.f32 %v1830, %v1894
  %v1896 = vpop.f32.mrf.mxu0
  %v1897 = vpop.f32.mrf.mxu0
  %v1898 = vadd.f32 %v1833, %v1897
  %v1899 = vpop.f32.mrf.mxu0
  %1900 = vmatprep.mubr.bf16.mxu0 0
  %1901 = vmatmul.mubr.bf16.gmra.mxu0 %v1634
  %v1902 = vpop.f32.mrf.mxu0
  %v1903 = vadd.f32 %v1838, %v1902
  %v1904 = vpop.f32.mrf.mxu0
  %v1905 = vpop.f32.mrf.mxu0
  %v1906 = vadd.f32 %v1841, %v1905
  %v1907 = vpop.f32.mrf.mxu0
  %1908 = vdwg.mxu0
  %v1909 = vlaneseq
  %v1910 = vand.u32 %v1909, 127
  %vm1911 = vcmp.lt.s32.totalorder %v1910, 0
  %v1912 = vsub.s32 0, %v1910
  %v1913 = vsel %vm1911, %v1912, %v1910
  %v1914 = vshrl.u32 %v1913, 2
  %v1915 = vand.u32 %v1913, 3
  %v1916 = vsub.s32 0, %v1915
  %v1917 = vsel %vm1911, %v1916, %v1915
  %vm1918 = vcmp.ne.s32.totalorder %v1917, 0
  %vm1919 = vcmp.lt.s32.totalorder %v1917, 0
  %vm1920 = vmand %vm1919, %vm1918
  %v1921 = vadd.s32 %v1917, 4
  %v1922 = vsel %vm1920, %v1921, %v1917
  %v1923 = vadd.f32 %v1879, %v1882
  %v1924 = vrot.slane %v1923, 4
  %v1925 = vadd.f32 %v1923, %v1924
  %v1926 = vrot.slane %v1925, 2
  %v1927 = vadd.f32 %v1925, %v1926
  %v1928 = vrot.slane %v1927, 1
  %v1929 = vadd.f32 %v1927, %v1928
  %v1930 = vadd.f32 %v1895, %v1898
  %v1931 = vrot.slane %v1930, 4
  %v1932 = vadd.f32 %v1930, %v1931
  %v1933 = vrot.slane %v1932, 2
  %v1934 = vadd.f32 %v1932, %v1933
  %v1935 = vrot.slane %v1934, 1
  %v1936 = vadd.f32 %v1934, %v1935
  %v1937 = vadd.f32 %v1887, %v1890
  %v1938 = vrot.slane %v1937, 4
  %v1939 = vadd.f32 %v1937, %v1938
  %v1940 = vrot.slane %v1939, 2
  %v1941 = vadd.f32 %v1939, %v1940
  %v1942 = vrot.slane %v1941, 1
  %v1943 = vadd.f32 %v1941, %v1942
  %v1944 = vadd.f32 %v1903, %v1906
  %v1945 = vrot.slane %v1944, 4
  %v1946 = vadd.f32 %v1944, %v1945
  %v1947 = vrot.slane %v1946, 2
  %v1948 = vadd.f32 %v1946, %v1947
  %v1949 = vrot.slane %v1948, 1
  %v1950 = vadd.f32 %v1948, %v1949
  %v1951 = vadd.f32 %v1929, %v1943
  %v1952 = vadd.f32 %v1936, %v1950
  %v1953 = vadd.f32 %v307, 0.0
  %vm1954 = vcmp.eq.s32.totalorder %v1922, 0
  %v1955 = vsel %vm1954, 1, 0
  %vm1956 = vcmp.eq.s32.totalorder %v1955, 1
  %vm1959 = vcmask 1041409
  %v1960 = vsel %vm1959, %v1952, %v1951
  %v1962 = vsel %vm1956, %v1960, 0.0
  %vm1963 = vcmask 1041408
  %v1964 = vsel %vm1963, %v1962, 0.0
  %1965 = vadd.xlane.f32.xlu0 %v1964
  %v1966 = vpop.xlane.xlu0 %1965
  %v1967 = vmul.f32 %v1966, 0.0009765625
  %v1968 = vlaneseq
  %v1969 = vshrl.u32 %v1968, 7
  %v1970 = vsub.s32 5, %v1969
  %v1971 = vrot.slane %v305, %v1970
  %v1972 = vmul.f32 %v1967, %v1971
  %v1973 = vadd.f32 %v1953, %v1972
  %vm1974 = vcmp.eq.s32.totalorder %v1922, 1
  %v1975 = vsel %vm1974, 1, 0
  %vm1976 = vcmp.eq.s32.totalorder %v1975, 1
  %v1977 = vsel %vm1976, %v1960, 0.0
  %v1978 = vsel %vm1963, %v1977, 0.0
  %1979 = vadd.xlane.f32.xlu0 %v1978
  %v1980 = vpop.xlane.xlu0 %1979
  %v1981 = vmul.f32 %v1980, 0.0009765625
  %v1982 = vlaneseq
  %v1983 = vshrl.u32 %v1982, 7
  %v1984 = vsub.s32 6, %v1983
  %v1985 = vrot.slane %v305, %v1984
  %v1986 = vmul.f32 %v1981, %v1985
  %v1987 = vadd.f32 %v1973, %v1986
  %vm1988 = vcmp.eq.s32.totalorder %v1922, 2
  %v1989 = vsel %vm1988, 1, 0
  %vm1990 = vcmp.eq.s32.totalorder %v1989, 1
  %v1991 = vsel %vm1990, %v1960, 0.0
  %v1992 = vsel %vm1963, %v1991, 0.0
  %1993 = vadd.xlane.f32.xlu0 %v1992
  %v1994 = vpop.xlane.xlu0 %1993
  %v1995 = vmul.f32 %v1994, 0.0009765625
  %v1996 = vlaneseq
  %v1997 = vshrl.u32 %v1996, 7
  %v1998 = vsub.s32 7, %v1997
  %v1999 = vrot.slane %v305, %v1998
  %v2000 = vmul.f32 %v1995, %v1999
  %v2001 = vadd.f32 %v1987, %v2000
  %vm2002 = vcmp.eq.s32.totalorder %v1922, 3
  %v2003 = vsel %vm2002, 1, 0
  %vm2004 = vcmp.eq.s32.totalorder %v2003, 1
  %v2005 = vsel %vm2004, %v1960, 0.0
  %v2006 = vsel %vm1963, %v2005, 0.0
  %2007 = vadd.xlane.f32.xlu0 %v2006
  %v2008 = vpop.xlane.xlu0 %2007
  %v2009 = vmul.f32 %v2008, 0.0009765625
  %v2010 = vlaneseq
  %v2011 = vshrl.u32 %v2010, 7
  %v2012 = vsub.s32 0, %v2011
  %v2013 = vrot.slane %v306, %v2012
  %v2014 = vmul.f32 %v2009, %v2013
  %v2015 = vadd.f32 %v2001, %v2014
  %v2016 = vmax.f32 %v2015, 0.0
  %v2017 = vlaneseq
  %v2018 = vshrl.u32 %v2017, 7
  %v2019 = vsub.s32 2, %v2018
  %v2020 = vrot.slane %v308, %v2019
  %v2021 = vmul.f32 %v2016, %v2020
  %vm2022 = vcmask 254976
  %v2023 = vsel %vm2022, %v2021, 0.0
  %2024 = vadd.xlane.f32.xlu0 %v2023
  %v2025 = vpop.xlane.xlu0 %2024
  %v2026 = vadd.f32 %v2025, %v309
  %v2027 = vxor.u32 %v2026, 2147483648
  %v2028 = vmul.f32 %v2027, 1.442695
  %v2029 = vpow.pop %v2028
  %v2030 = vadd.f32 %v2029, 1.0
  %v2031 = vrcp.pop %v2030
  %v2032 = vmul.f32 1.0, %v2031
  %2034 = vset.pattern.permute.xlu0 0
  %2035 = vperm.xlu0 %2034, %v2032
  %v2036 = vpop.permute.xlu0 %2035
  %v2038 = vsel %vm1956, %v2036, 0.0
  %v2039 = vadd.f32 %v2038, 0.0
  %v2040 = vlaneseq
  %v2041 = vshrl.u32 %v2040, 7
  %v2042 = vsub.s32 3, %v2041
  %v2043 = vrot.slane %v308, %v2042
  %v2044 = vmul.f32 %v2016, %v2043
  %v2045 = vsel %vm2022, %v2044, 0.0
  %2046 = vadd.xlane.f32.xlu0 %v2045
  %v2047 = vpop.xlane.xlu0 %2046
  %v2048 = vadd.f32 %v2047, %v309
  %v2049 = vxor.u32 %v2048, 2147483648
  %v2050 = vmul.f32 %v2049, 1.442695
  %v2051 = vpow.pop %v2050
  %v2052 = vadd.f32 %v2051, 1.0
  %v2053 = vrcp.pop %v2052
  %v2054 = vmul.f32 1.0, %v2053
  %2056 = vset.pattern.permute.xlu0 1
  %2057 = vperm.xlu0 %2056, %v2054
  %v2058 = vpop.permute.xlu0 %2057
  %v2060 = vsel %vm1976, %v2058, 0.0
  %v2061 = vadd.f32 %v2039, %v2060
  %v2062 = vlaneseq
  %v2063 = vshrl.u32 %v2062, 7
  %v2064 = vsub.s32 4, %v2063
  %v2065 = vrot.slane %v308, %v2064
  %v2066 = vmul.f32 %v2016, %v2065
  %v2067 = vsel %vm2022, %v2066, 0.0
  %2068 = vadd.xlane.f32.xlu0 %v2067
  %v2069 = vpop.xlane.xlu0 %2068
  %v2070 = vadd.f32 %v2069, %v309
  %v2071 = vxor.u32 %v2070, 2147483648
  %v2072 = vmul.f32 %v2071, 1.442695
  %v2073 = vpow.pop %v2072
  %v2074 = vadd.f32 %v2073, 1.0
  %v2075 = vrcp.pop %v2074
  %v2076 = vmul.f32 1.0, %v2075
  %2078 = vset.pattern.permute.xlu0 2
  %2079 = vperm.xlu0 %2078, %v2076
  %v2080 = vpop.permute.xlu0 %2079
  %v2082 = vsel %vm1990, %v2080, 0.0
  %v2083 = vadd.f32 %v2061, %v2082
  %v2084 = vlaneseq
  %v2085 = vshrl.u32 %v2084, 7
  %v2086 = vsub.s32 5, %v2085
  %v2087 = vrot.slane %v308, %v2086
  %v2088 = vmul.f32 %v2016, %v2087
  %v2089 = vsel %vm2022, %v2088, 0.0
  %2090 = vadd.xlane.f32.xlu0 %v2089
  %v2091 = vpop.xlane.xlu0 %2090
  %v2092 = vadd.f32 %v2091, %v309
  %v2093 = vxor.u32 %v2092, 2147483648
  %v2094 = vmul.f32 %v2093, 1.442695
  %v2095 = vpow.pop %v2094
  %v2096 = vadd.f32 %v2095, 1.0
  %v2097 = vrcp.pop %v2096
  %v2098 = vmul.f32 1.0, %v2097
  %2100 = vset.pattern.permute.xlu0 3
  %2101 = vperm.xlu0 %2100, %v2098
  %v2102 = vpop.permute.xlu0 %2101
  %v2104 = vsel %vm2004, %v2102, 0.0
  %v2105 = vadd.f32 %v2083, %v2104
  %v2108 = vunpack.c.l.s4 1966171168
  %v2109 = vunpack.c.0.s8 %v2108
  %v2110 = vlaneseq
  %v2111 = vshrl.u32 %v2110, 7
  %v2112 = vsub.s32 %v2109, %v2111
  %v2113 = vrot.slane %v2105, %v2112
  %v2114 = vcombine.high %v2113, %v2113
  %v2116 = vunpack.c.l.s4 1966171168
  %v2117 = vunpack.c.0.s8 %v2116
  %v2118 = vlaneseq
  %v2119 = vshrl.u32 %v2118, 7
  %v2120 = vsub.s32 %v2117, %v2119
  %v2121 = vrot.slane %v2113, %v2120
  %v2123 = vunpack.c.l.s4 1966171168
  %v2124 = vunpack.c.0.s8 %v2123
  %v2125 = vlaneseq
  %v2126 = vshrl.u32 %v2125, 7
  %v2127 = vsub.s32 %v2124, %v2126
  %v2128 = vrot.slane %v2114, %v2127
  %v2129 = vlaneseq
  %v2130 = vshrl.u32 %v2129, 7
  %v2131 = vsub.s32 0, %v2130
  %v2132 = vrot.slane %v2121, %v2131
  %v2133 = vlaneseq
  %v2134 = vshrl.u32 %v2133, 7
  %v2135 = vsub.s32 0, %v2134
  %v2136 = vrot.slane %v2128, %v2135
  %v2139 = vmul.f32 %v1879, %v2132
  %v2140 = vmul.f32 %v1882, %v2132
  %v2141 = vmul.f32 %v1895, %v2136
  %v2142 = vmul.f32 %v1898, %v2136
  %v2143 = vadd.f32 %v2139, %v1253
  %v2144 = vadd.f32 %v2140, %v1254
  %v2145 = vadd.f32 %v2141, %v1255
  %v2146 = vadd.f32 %v2142, %v1256
  %v2147 = vmax.f32 %v2143, 0.0
  %v2148 = vmax.f32 %v2144, 0.0
  %v2149 = vmax.f32 %v2145, 0.0
  %v2150 = vmax.f32 %v2146, 0.0
  %v2151 = vmul.f32 %v1887, %v2132
  %v2152 = vmul.f32 %v1890, %v2132
  %v2153 = vmul.f32 %v1903, %v2136
  %v2154 = vmul.f32 %v1906, %v2136
  %v2155 = vadd.f32 %v2151, %v1261
  %v2156 = vadd.f32 %v2152, %v1262
  %v2157 = vadd.f32 %v2153, %v1263
  %v2158 = vadd.f32 %v2154, %v1264
  %v2159 = vmax.f32 %v2155, 0.0
  %v2160 = vmax.f32 %v2156, 0.0
  %v2161 = vmax.f32 %v2157, 0.0
  %v2162 = vmax.f32 %v2158, 0.0
  %v2163 = vpack.c.bf16 %v2148, %v2147
  %v2164 = vpack.c.bf16 %v2150, %v2149
  %v2165 = vpack.c.bf16 %v2160, %v2159
  %v2166 = vpack.c.bf16 %v2162, %v2161
  %v2168 = vshrl.u32 %v2165, 16
  %v2170 = vrot.slane %v2168, 7
  %v2171 = vshll.u32 %v2165, 16
  %v2173 = vor.u32 %v2170, %v2171
  %v2175 = vshrl.u32 %v2166, 16
  %v2177 = vrot.slane %v2175, 7
  %v2178 = vshll.u32 %v2166, 16
  %v2180 = vor.u32 %v2177, %v2178
  %v2183 = vsel %vm332, %v2165, %v2173
  %v2184 = vsel %vm332, %v2166, %v2180
  %v2233 = vunpack.c.l.b16 %v251
  %v2234 = vunpack.c.l.b16 %v252
  %v2235 = vunpack.c.l.b16 %v253
  %v2236 = vunpack.c.l.b16 %v254
  %v2237 = vunpack.c.l.b16 %v255
  %v2238 = vunpack.c.l.b16 %v256
  %v2239 = vunpack.c.l.b16 %v257
  %v2240 = vunpack.c.l.b16 %v258
  %v2241 = vunpack.c.l.b16 %v259
  %v2242 = vunpack.c.l.b16 %v260
  %v2243 = vunpack.c.l.b16 %v261
  %v2244 = vunpack.c.l.b16 %v262
  %v2245 = vunpack.c.l.b16 %v263
  %v2246 = vunpack.c.l.b16 %v264
  %v2247 = vunpack.c.l.b16 %v265
  %v2248 = vunpack.c.l.b16 %v266
  %v2249 = vunpack.c.l.b16 %v267
  %v2250 = vunpack.c.l.b16 %v268
  %v2251 = vunpack.c.l.b16 %v269
  %v2252 = vunpack.c.l.b16 %v270
  %v2253 = vunpack.c.l.b16 %v271
  %v2254 = vunpack.c.l.b16 %v272
  %v2255 = vunpack.c.l.b16 %v273
  %v2256 = vunpack.c.l.b16 %v274
  %v2257 = vunpack.c.l.b16 %v275
  %v2258 = vunpack.c.l.b16 %v276
  %v2259 = vunpack.c.l.b16 %v277
  %v2260 = vunpack.c.l.b16 %v278
  %v2261 = vunpack.c.l.b16 %v279
  %v2262 = vunpack.c.l.b16 %v280
  %v2263 = vunpack.c.l.b16 %v281
  %v2264 = vunpack.c.l.b16 %v282
  %v2265 = vunpack.c.l.b16 %v283
  %v2266 = vunpack.c.l.b16 %v284
  %v2267 = vunpack.c.l.b16 %v285
  %v2268 = vunpack.c.l.b16 %v286
  %v2269 = vunpack.c.l.b16 %v287
  %v2270 = vunpack.c.l.b16 %v288
  %v2271 = vunpack.c.l.b16 %v289
  %v2272 = vunpack.c.l.b16 %v290
  %v2273 = vunpack.c.l.b16 %v291
  %v2274 = vunpack.c.l.b16 %v292
  %v2275 = vunpack.c.l.b16 %v293
  %v2276 = vunpack.c.l.b16 %v294
  %v2277 = vunpack.c.l.b16 %v295
  %v2278 = vunpack.c.l.b16 %v296
  %v2279 = vunpack.c.l.b16 %v297
  %v2280 = vunpack.c.l.b16 %v298
  %v2281 = vpack.c.b16 %v2234, %v2233
  %v2282 = vpack.c.b16 %v2236, %v2235
  %v2283 = vpack.c.b16 %v2238, %v2237
  %v2284 = vpack.c.b16 %v2240, %v2239
  %v2285 = vpack.c.b16 %v2242, %v2241
  %v2286 = vpack.c.b16 %v2244, %v2243
  %v2287 = vpack.c.b16 %v2246, %v2245
  %v2288 = vpack.c.b16 %v2248, %v2247
  %v2289 = vpack.c.b16 %v2250, %v2249
  %v2290 = vpack.c.b16 %v2252, %v2251
  %v2291 = vpack.c.b16 %v2254, %v2253
  %v2292 = vpack.c.b16 %v2256, %v2255
  %v2293 = vpack.c.b16 %v2258, %v2257
  %v2294 = vpack.c.b16 %v2260, %v2259
  %v2295 = vpack.c.b16 %v2262, %v2261
  %v2296 = vpack.c.b16 %v2264, %v2263
  %v2297 = vpack.c.b16 %v2266, %v2265
  %v2298 = vpack.c.b16 %v2268, %v2267
  %v2299 = vpack.c.b16 %v2270, %v2269
  %v2300 = vpack.c.b16 %v2272, %v2271
  %v2301 = vpack.c.b16 %v2274, %v2273
  %v2302 = vpack.c.b16 %v2276, %v2275
  %v2303 = vpack.c.b16 %v2278, %v2277
  %v2304 = vpack.c.b16 %v2280, %v2279
  %2329 = vmatprep.subr.bf16.mxu0 0
  %2330 = vmatpush1.bf16.msra.mxu0 %v2288
  %2331 = vmatprep.subr.bf16.mxu0 0
  %2332 = vmatpush1.bf16.msra.mxu0 %v2287
  %2333 = vmatprep.subr.bf16.mxu0 0
  %2334 = vmatpush1.bf16.msra.mxu0 %v2286
  %2335 = vmatprep.subr.bf16.mxu0 0
  %2336 = vmatpush1.bf16.msra.mxu0 %v2285
  %2337 = vmatprep.subr.bf16.mxu0 0
  %2338 = vmatpush1.bf16.msra.mxu0 %v2284
  %2339 = vmatprep.subr.bf16.mxu0 0
  %2340 = vmatpush1.bf16.msra.mxu0 %v2283
  %2341 = vmatprep.subr.bf16.mxu0 0
  %2342 = vmatpush1.bf16.msra.mxu0 %v2282
  %2343 = vmatprep.subr.bf16.mxu0 0
  %2344 = vmatpush1.bf16.msra.mxu0 %v2281
  %2345 = vmatprep.subr.bf16.mxu0 0
  %2346 = vmatpush2.bf16.msra.mxu0 %v2296
  %2347 = vmatprep.subr.bf16.mxu0 0
  %2348 = vmatpush2.bf16.msra.mxu0 %v2295
  %2349 = vmatprep.subr.bf16.mxu0 0
  %2350 = vmatpush2.bf16.msra.mxu0 %v2294
  %2351 = vmatprep.subr.bf16.mxu0 0
  %2352 = vmatpush2.bf16.msra.mxu0 %v2293
  %2353 = vmatprep.subr.bf16.mxu0 0
  %2354 = vmatpush2.bf16.msra.mxu0 %v2292
  %2355 = vmatprep.subr.bf16.mxu0 0
  %2356 = vmatpush2.bf16.msra.mxu0 %v2291
  %2357 = vmatprep.subr.bf16.mxu0 0
  %2358 = vmatpush2.bf16.msra.mxu0 %v2290
  %2359 = vmatprep.subr.bf16.mxu0 0
  %2360 = vmatpush2.bf16.msra.mxu0 %v2289
  %2361 = vmatprep.mubr.bf16.mxu0 %v2163
  %2362 = vmatmul.mubr.bf16.gmra.mxu0 %v2183
  %v2363 = vpop.f32.mrf.mxu0
  %v2364 = vadd.f32 0.0, %v2363
  %v2365 = vpop.f32.mrf.mxu0
  %v2366 = vpop.f32.mrf.mxu0
  %v2367 = vadd.f32 0.0, %v2366
  %v2368 = vpop.f32.mrf.mxu0
  %2369 = vmatprep.mubr.bf16.mxu0 %v2164
  %2370 = vmatmul.mubr.bf16.gmra.mxu0 %v2184
  %v2371 = vpop.f32.mrf.mxu0
  %v2372 = vadd.f32 0.0, %v2371
  %v2373 = vpop.f32.mrf.mxu0
  %v2374 = vpop.f32.mrf.mxu0
  %v2375 = vadd.f32 0.0, %v2374
  %v2376 = vpop.f32.mrf.mxu0
  %2377 = vdwg.mxu0
  %2378 = vmatprep.subr.bf16.mxu0 0
  %2379 = vmatpush1.bf16.msra.mxu0 %v2304
  %2380 = vmatprep.subr.bf16.mxu0 0
  %2381 = vmatpush1.bf16.msra.mxu0 %v2303
  %2382 = vmatprep.subr.bf16.mxu0 0
  %2383 = vmatpush1.bf16.msra.mxu0 %v2302
  %2384 = vmatprep.subr.bf16.mxu0 0
  %2385 = vmatpush1.bf16.msra.mxu0 %v2301
  %2386 = vmatprep.subr.bf16.mxu0 0
  %2387 = vmatpush1.bf16.msra.mxu0 %v2300
  %2388 = vmatprep.subr.bf16.mxu0 0
  %2389 = vmatpush1.bf16.msra.mxu0 %v2299
  %2390 = vmatprep.subr.bf16.mxu0 0
  %2391 = vmatpush1.bf16.msra.mxu0 %v2298
  %2392 = vmatprep.subr.bf16.mxu0 0
  %2393 = vmatpush1.bf16.msra.mxu0 %v2297
  %2394 = vmatprep.subr.bf16.mxu0 0
  %2395 = vmatpush2.bf16.msra.mxu0 0
  %2396 = vmatprep.subr.bf16.mxu0 0
  %2397 = vmatpush2.bf16.msra.mxu0 0
  %2398 = vmatprep.subr.bf16.mxu0 0
  %2399 = vmatpush2.bf16.msra.mxu0 0
  %2400 = vmatprep.subr.bf16.mxu0 0
  %2401 = vmatpush2.bf16.msra.mxu0 0
  %2402 = vmatprep.subr.bf16.mxu0 0
  %2403 = vmatpush2.bf16.msra.mxu0 0
  %2404 = vmatprep.subr.bf16.mxu0 0
  %2405 = vmatpush2.bf16.msra.mxu0 0
  %2406 = vmatprep.subr.bf16.mxu0 0
  %2407 = vmatpush2.bf16.msra.mxu0 0
  %2408 = vmatprep.subr.bf16.mxu0 0
  %2409 = vmatpush2.bf16.msra.mxu0 0
  %2410 = vmatprep.mubr.bf16.mxu0 0
  %2411 = vmatmul.mubr.bf16.gmra.mxu0 %v2165
  %v2412 = vpop.f32.mrf.mxu0
  %v2413 = vadd.f32 %v2364, %v2412
  %v2414 = vpop.f32.mrf.mxu0
  %v2415 = vpop.f32.mrf.mxu0
  %v2416 = vadd.f32 %v2367, %v2415
  %v2417 = vpop.f32.mrf.mxu0
  %2418 = vmatprep.mubr.bf16.mxu0 0
  %2419 = vmatmul.mubr.bf16.gmra.mxu0 %v2166
  %v2420 = vpop.f32.mrf.mxu0
  %v2421 = vadd.f32 %v2372, %v2420
  %v2422 = vpop.f32.mrf.mxu0
  %v2423 = vpop.f32.mrf.mxu0
  %v2424 = vadd.f32 %v2375, %v2423
  %v2425 = vpop.f32.mrf.mxu0
  %2426 = vdwg.mxu0
  %v2427 = vadd.f32 %v2413, %v304
  %v2428 = vadd.f32 %v2416, %v304
  %v2429 = vadd.f32 %v2421, %v304
  %v2430 = vadd.f32 %v2424, %v304
  %v2431 = vadd.f32 %v2427, %v23
  %v2432 = vadd.f32 %v2428, %v24
  %v2433 = vadd.f32 %v2429, %v25
  %v2434 = vadd.f32 %v2430, %v26
  %v2435 = vmax.f32 %v2431, 0.0
  %v2436 = vmax.f32 %v2432, 0.0
  %v2437 = vmax.f32 %v2433, 0.0
  %v2438 = vmax.f32 %v2434, 0.0
  %2439 = vst.msk [vmem:[%s5] sm:$0xff] %vm354, %v2435
  %2440 = vst.msk [vmem:[%s5 + $0x8] sm:$0xff] %vm354, %v2436
  %2441 = vst.msk [vmem:[%s5 + $0x10] sm:$0xff] %vm354, %v2437
  %2442 = vst.msk [vmem:[%s5 + $0x18] sm:$0xff] %vm354, %v2438
  // Predicated region
  $region22: #{dual_up_down_forward.1} parent=0 // pred_check
    _
  $region23: #{dual_up_down_forward.1} parent=0 // pred_check_branch
    %2444 = sbr.rel (0) target = $region25
  $region24: #{dual_up_down_forward.1} parent=0 // pred_region
    _
  $region25: #{dual_up_down_forward.1} parent=0 // pred_fallthru
    _
  // Predicated region
  $region26: #{dual_up_down_forward.1} parent=0 // pred_check
    _
  $region27: #{dual_up_down_forward.1} parent=0 // pred_check_branch
    %2446 = sbr.rel (0) target = $region29
  $region28: #{dual_up_down_forward.1} parent=0 // pred_region
    _
  $region29: #{dual_up_down_forward.1} parent=0 // pred_fallthru
    _
  // Predicated region
  $region30: #{dual_up_down_forward.1} parent=0 // pred_check
    _
  $region31: #{dual_up_down_forward.1} parent=0 // pred_check_branch
    %2448 = sbr.rel (0) target = $region33
  $region32: #{dual_up_down_forward.1} parent=0 // pred_region
    _
  $region33: #{dual_up_down_forward.1} parent=0 // pred_fallthru
    _
  // Predicated region
  $region34: #{dual_up_down_forward.1} parent=0 // pred_check
    _
  $region35: #{dual_up_down_forward.1} parent=0 // pred_check_branch
    %2450 = sbr.rel (0) target = $region37
  $region36: #{dual_up_down_forward.1} parent=0 // pred_region
    _
  $region37: #{dual_up_down_forward.1} parent=0 // pred_fallthru
    _

</llo_original>
